<compile_context>
chip_gen: v7x
topology: tpu7x:2x2x1
jax: 0.10.0
libtpu: 0.0.40
codegen_flags: <defaults>
</compile_context>

<pallas_src>
import functools
import math

import jax
import jax.numpy as jnp
from jax.experimental import pallas as pl
from jax.experimental.pallas import tpu as pltpu


def _round_up(v, m):
    return ((v + m - 1) // m) * m


def _mlp_kernel(n_layers,
                x_ref, w1_ref, b1_ref, w2_ref, b2_ref,
                wfcs_ref, bfcs_ref, w3_ref, b3_ref, w4_ref, b4_ref,
                o_ref):
    bf16 = jnp.bfloat16
    # fc + ReLU  (bias add + ReLU fused into the matmul epilogue expression)
    h = jnp.maximum(
        jnp.dot(x_ref[...], w1_ref[...], preferred_element_type=jnp.float32)
        + b1_ref[...], 0.0)
    # fc2 + ReLU
    h = jnp.maximum(
        jnp.dot(h.astype(bf16), w2_ref[...], preferred_element_type=jnp.float32)
        + b2_ref[...], 0.0)
    # fcs: chain of Linear(256,256) with NO activation in between.
    # Static unroll gives the LLO scheduler full visibility at small n_layers.
    # TODO(synk): for very deep stacks (n_layers >~ 32) stream wfcs/bfcs over a
    # second "arbitrary" grid axis (or lax.fori_loop with dynamic wfcs_ref[l])
    # to decouple VMEM / code size from depth, esp. on v7x (64 MiB VMEM).
    for l in range(n_layers):
        h = (jnp.dot(h.astype(bf16), wfcs_ref[l], preferred_element_type=jnp.float32)
             + bfcs_ref[l])
    # relu_fcs
    h = jnp.maximum(h, 0.0)
    # fc3 + ReLU
    h = jnp.maximum(
        jnp.dot(h.astype(bf16), w3_ref[...], preferred_element_type=jnp.float32)
        + b3_ref[...], 0.0)
    # fc4 (no activation)
    o_ref[...] = (jnp.dot(h.astype(bf16), w4_ref[...],
                          preferred_element_type=jnp.float32) + b4_ref[...])


def prepare_params(params, input_dim, output_dim):
    """One-time prep (outside the per-call path): pad narrow feature dims to
    128 lanes with zeros (math-preserving) and cast weights to bf16."""
    w1, b1, w2, b2, wfcs, bfcs, w3, b3, w4, b4 = params
    bf = jnp.bfloat16
    DIN_P = max(128, _round_up(input_dim, 128))
    DOUT_P = max(128, _round_up(output_dim, 128))

    w1_p = jnp.zeros((DIN_P, 128), bf).at[:input_dim, :].set(w1.astype(bf))
    w4_p = jnp.zeros((128, DOUT_P), bf).at[:, :output_dim].set(w4.astype(bf))
    b4_p = jnp.zeros((1, DOUT_P), jnp.float32).at[:, :output_dim].set(b4)

    return dict(
        w1=w1_p, b1=b1.astype(jnp.float32),
        w2=w2.astype(bf), b2=b2.astype(jnp.float32),
        wfcs=wfcs.astype(bf), bfcs=bfcs.astype(jnp.float32),
        w3=w3.astype(bf), b3=b3.astype(jnp.float32),
        w4=w4_p, b4=b4_p,
        din_p=DIN_P, dout_p=DOUT_P,
        input_dim=input_dim, output_dim=output_dim,
    )


def simple_model_forward(x, prepped, *, batch_tile=256):
    """x: (B, input_dim) float32. Returns (B, output_dim) float32."""
    B, input_dim = x.shape
    assert input_dim == prepped["input_dim"]
    DIN_P, DOUT_P = prepped["din_p"], prepped["dout_p"]
    output_dim = prepped["output_dim"]
    n_layers = prepped["wfcs"].shape[0]

    # Pick the batch tile: multiple of 8, no hard assert — pad B instead.
    # Keep >= 2 grid steps when possible so the "parallel" axis can be split
    # across the 2 TensorCores on v7x.
    tile = _round_up(min(batch_tile, _round_up(B, 8)), 8)
    if _round_up(B, tile) // tile < 2 and tile > 8:
        tile = _round_up(tile // 2, 8)
    B_pad = _round_up(B, tile)

    # Per-call work on x only: pad batch + input features, cast to bf16.
    x_p = jnp.zeros((B_pad, DIN_P), jnp.bfloat16).at[:B, :input_dim].set(
        x.astype(jnp.bfloat16))

    grid = (B_pad // tile,)
    full = lambda *shape: pl.BlockSpec(shape, lambda i: (0,) * len(shape))

    # Raise the scoped-VMEM limit only if the (double-buffered) resident
    # weights would exceed the default; harmless no-op at small n_layers.
    est_bytes = 2 * (
        tile * DIN_P * 2 + tile * DOUT_P * 4                      # x / out tiles
        + 2 * (DIN_P * 128 + 128 * 256 + n_layers * 256 * 256
               + 256 * 128 + 128 * DOUT_P)                        # bf16 weights
        + 4 * (128 + 256 + n_layers * 256 + 128 + DOUT_P))        # f32 biases
    vmem_limit = None
    if est_bytes > 30 * 1024 * 1024:
        vmem_limit = min(int(est_bytes * 3 // 2), 120 * 1024 * 1024)

    out_p = pl.pallas_call(
        functools.partial(_mlp_kernel, n_layers),
        out_shape=jax.ShapeDtypeStruct((B_pad, DOUT_P), jnp.float32),
        grid=grid,
        in_specs=[
            pl.BlockSpec((tile, DIN_P), lambda i: (i, 0)),   # x
            full(DIN_P, 128),            # w1 (bf16, padded rows)
            full(1, 128),                # b1
            full(128, 256),              # w2 (bf16)
            full(1, 256),                # b2
            full(n_layers, 256, 256),    # wfcs (bf16, stacked)
            full(n_layers, 1, 256),      # bfcs (stacked)
            full(256, 128),              # w3 (bf16)
            full(1, 128),                # b3
            full(128, DOUT_P),           # w4 (bf16, padded cols)
            full(1, DOUT_P),             # b4 (padded cols)
        ],
        out_specs=pl.BlockSpec((tile, DOUT_P), lambda i: (i, 0)),
        compiler_params=pltpu.CompilerParams(
            dimension_semantics=("parallel",),
            vmem_limit_bytes=vmem_limit),
    )(x_p,
      prepped["w1"], prepped["b1"], prepped["w2"], prepped["b2"],
      prepped["wfcs"], prepped["bfcs"], prepped["w3"], prepped["b3"],
      prepped["w4"], prepped["b4"])

    return out_p[:B, :output_dim]


def init_params(key, input_dim, output_dim, n_layers):
    """Deterministic PyTorch-Linear-style init: U(-1/sqrt(fan_in), 1/sqrt(fan_in))."""
    def linear(k, fan_in, fan_out):
        kw, kb = jax.random.split(k)
        bound = 1.0 / math.sqrt(fan_in)
        w = jax.random.uniform(kw, (fan_in, fan_out), jnp.float32, -bound, bound)
        b = jax.random.uniform(kb, (1, fan_out), jnp.float32, -bound, bound)
        return w, b

    keys = jax.random.split(key, 4 + n_layers)
    w1, b1 = linear(keys[0], input_dim, 128)
    w2, b2 = linear(keys[1], 128, 256)
    wfcs_list, bfcs_list = [], []
    for l in range(n_layers):
        w, b = linear(keys[2 + l], 256, 256)
        wfcs_list.append(w)
        bfcs_list.append(b)
    wfcs = jnp.stack(wfcs_list, axis=0)               # (n_layers, 256, 256)
    bfcs = jnp.stack(bfcs_list, axis=0)               # (n_layers, 1, 256)
    w3, b3 = linear(keys[2 + n_layers], 256, 128)
    w4, b4 = linear(keys[3 + n_layers], 128, output_dim)
    return (w1, b1, w2, b2, wfcs, bfcs, w3, b3, w4, b4)


def reference_forward(x, params, n_layers):
    """Pure-JAX reference mirroring the kernel's bf16-weights / f32-accumulate."""
    w1, b1, w2, b2, wfcs, bfcs, w3, b3, w4, b4 = params
    bf = jnp.bfloat16

    def lin(h, w, b):
        return jnp.dot(h.astype(bf), w.astype(bf),
                       preferred_element_type=jnp.float32) + b

    h = jnp.maximum(lin(x, w1, b1), 0.0)
    h = jnp.maximum(lin(h, w2, b2), 0.0)
    for l in range(n_layers):
        h = lin(h, wfcs[l], bfcs[l])
    h = jnp.maximum(h, 0.0)
    h = jnp.maximum(lin(h, w3, b3), 0.0)
    return lin(h, w4, b4)


if __name__ == "__main__":
    input_dim, output_dim, n_layers = 32, 8, 2
    batch = 256          # 2 x 128-row tiles: fills MXU rows, uses both v7x TCs

    key = jax.random.PRNGKey(0)
    kx, kp = jax.random.split(key)
    x = jax.random.normal(kx, (batch, input_dim), jnp.float32)
    params = init_params(kp, input_dim, output_dim, n_layers)
    prepped = prepare_params(params, input_dim, output_dim)

    out = simple_model_forward(x, prepped, batch_tile=128)
    out = jax.block_until_ready(out)

    ref = reference_forward(x, params, n_layers)
    assert out.shape == (batch, output_dim)
    assert jnp.allclose(out, ref, atol=1e-2, rtol=1e-2), "mismatch vs JAX reference"

    print("KERNEL_OK")
</pallas_src>

<mosaic_0001>
module attributes {stable_mosaic.version = 11 : i64} {
  func.func @_mlp_kernel(%arg0: i32, %arg1: memref<128x128xbf16, #tpu.memory_space<vmem>>, %arg2: memref<128x128xbf16, #tpu.memory_space<vmem>>, %arg3: memref<1x128xf32, #tpu.memory_space<vmem>>, %arg4: memref<128x256xbf16, #tpu.memory_space<vmem>>, %arg5: memref<1x256xf32, #tpu.memory_space<vmem>>, %arg6: memref<2x256x256xbf16, #tpu.memory_space<vmem>>, %arg7: memref<2x1x256xf32, #tpu.memory_space<vmem>>, %arg8: memref<256x128xbf16, #tpu.memory_space<vmem>>, %arg9: memref<1x128xf32, #tpu.memory_space<vmem>>, %arg10: memref<128x128xbf16, #tpu.memory_space<vmem>>, %arg11: memref<1x128xf32, #tpu.memory_space<vmem>>, %arg12: memref<128x128xf32, #tpu.memory_space<vmem>>) attributes {dimension_semantics = [#tpu.dimension_semantics<parallel>], iteration_bounds = array<i64: 2>, scalar_prefetch = 0 : i64, scratch_operands = 0 : i64, tpu.core_type = #tpu.core_type<tc>, window_params = [{transform_indices = @transform_0, window_bounds = array<i64: 128, 128>}, {pipeline_mode = #tpu.pipeline_mode<synchronous>, transform_indices = @transform_1, window_bounds = array<i64: 128, 128>}, {pipeline_mode = #tpu.pipeline_mode<synchronous>, transform_indices = @transform_2, window_bounds = array<i64: 1, 128>}, {pipeline_mode = #tpu.pipeline_mode<synchronous>, transform_indices = @transform_3, window_bounds = array<i64: 128, 256>}, {pipeline_mode = #tpu.pipeline_mode<synchronous>, transform_indices = @transform_4, window_bounds = array<i64: 1, 256>}, {pipeline_mode = #tpu.pipeline_mode<synchronous>, transform_indices = @transform_5, window_bounds = array<i64: 2, 256, 256>}, {pipeline_mode = #tpu.pipeline_mode<synchronous>, transform_indices = @transform_6, window_bounds = array<i64: 2, 1, 256>}, {pipeline_mode = #tpu.pipeline_mode<synchronous>, transform_indices = @transform_7, window_bounds = array<i64: 256, 128>}, {pipeline_mode = #tpu.pipeline_mode<synchronous>, transform_indices = @transform_8, window_bounds = array<i64: 1, 128>}, {pipeline_mode = #tpu.pipeline_mode<synchronous>, transform_indices = @transform_9, window_bounds = array<i64: 128, 128>}, {pipeline_mode = #tpu.pipeline_mode<synchronous>, transform_indices = @transform_10, window_bounds = array<i64: 1, 128>}, {transform_indices = @transform_11, window_bounds = array<i64: 128, 128>}]} {
    %c0 = arith.constant 0 : index
    %c0_0 = arith.constant 0 : index
    %0 = vector.load %arg1[%c0, %c0_0] : memref<128x128xbf16, #tpu.memory_space<vmem>>, vector<128x128xbf16>
    %c0_1 = arith.constant 0 : index
    %c0_2 = arith.constant 0 : index
    %1 = vector.load %arg2[%c0_1, %c0_2] : memref<128x128xbf16, #tpu.memory_space<vmem>>, vector<128x128xbf16>
    %cst = arith.constant dense<0.000000e+00> : vector<128x128xf32>
    %2 = tpu.matmul %0, %1, %cst {dimension_numbers = #tpu.dot_dimension_numbers<[1], [0], [0], [1], [0, 0, 1, 1], [], []>} : vector<128x128xbf16>, vector<128x128xbf16>, vector<128x128xf32> -> vector<128x128xf32>
    %c0_3 = arith.constant 0 : index
    %c0_4 = arith.constant 0 : index
    %3 = vector.load %arg3[%c0_3, %c0_4] : memref<1x128xf32, #tpu.memory_space<vmem>>, vector<1x128xf32>
    %4 = vector.broadcast %3 : vector<1x128xf32> to vector<128x128xf32>
    %5 = arith.addf %2, %4 : vector<128x128xf32>
    %cst_5 = arith.constant 0.000000e+00 : f32
    %6 = vector.broadcast %cst_5 : f32 to vector<128x128xf32>
    %7 = arith.maximumf %5, %6 : vector<128x128xf32>
    %8 = arith.truncf %7 : vector<128x128xf32> to vector<128x128xbf16>
    %c0_6 = arith.constant 0 : index
    %c0_7 = arith.constant 0 : index
    %9 = vector.load %arg4[%c0_6, %c0_7] : memref<128x256xbf16, #tpu.memory_space<vmem>>, vector<128x256xbf16>
    %cst_8 = arith.constant dense<0.000000e+00> : vector<128x256xf32>
    %10 = tpu.matmul %8, %9, %cst_8 {dimension_numbers = #tpu.dot_dimension_numbers<[1], [0], [0], [1], [0, 0, 1, 1], [], []>} : vector<128x128xbf16>, vector<128x256xbf16>, vector<128x256xf32> -> vector<128x256xf32>
    %c0_9 = arith.constant 0 : index
    %c0_10 = arith.constant 0 : index
    %11 = vector.load %arg5[%c0_9, %c0_10] : memref<1x256xf32, #tpu.memory_space<vmem>>, vector<1x256xf32>
    %12 = vector.broadcast %11 : vector<1x256xf32> to vector<128x256xf32>
    %13 = arith.addf %10, %12 : vector<128x256xf32>
    %cst_11 = arith.constant 0.000000e+00 : f32
    %14 = vector.broadcast %cst_11 : f32 to vector<128x256xf32>
    %15 = arith.maximumf %13, %14 : vector<128x256xf32>
    %16 = arith.truncf %15 : vector<128x256xf32> to vector<128x256xbf16>
    %c0_12 = arith.constant 0 : index
    %c0_13 = arith.constant 0 : index
    %c0_14 = arith.constant 0 : index
    %17 = vector.load %arg6[%c0_12, %c0_13, %c0_14] : memref<2x256x256xbf16, #tpu.memory_space<vmem>>, vector<1x256x256xbf16>
    %18 = vector.shape_cast %17 : vector<1x256x256xbf16> to vector<256x256xbf16>
    %cst_15 = arith.constant dense<0.000000e+00> : vector<128x256xf32>
    %19 = tpu.matmul %16, %18, %cst_15 {dimension_numbers = #tpu.dot_dimension_numbers<[1], [0], [0], [1], [0, 0, 1, 1], [], []>} : vector<128x256xbf16>, vector<256x256xbf16>, vector<128x256xf32> -> vector<128x256xf32>
    %c0_16 = arith.constant 0 : index
    %c0_17 = arith.constant 0 : index
    %c0_18 = arith.constant 0 : index
    %20 = vector.load %arg7[%c0_16, %c0_17, %c0_18] : memref<2x1x256xf32, #tpu.memory_space<vmem>>, vector<1x1x256xf32>
    %21 = vector.shape_cast %20 : vector<1x1x256xf32> to vector<1x256xf32>
    %22 = vector.broadcast %21 : vector<1x256xf32> to vector<128x256xf32>
    %23 = arith.addf %19, %22 : vector<128x256xf32>
    %24 = arith.truncf %23 : vector<128x256xf32> to vector<128x256xbf16>
    %c1 = arith.constant 1 : index
    %c0_19 = arith.constant 0 : index
    %c0_20 = arith.constant 0 : index
    %25 = vector.load %arg6[%c1, %c0_19, %c0_20] : memref<2x256x256xbf16, #tpu.memory_space<vmem>>, vector<1x256x256xbf16>
    %26 = vector.shape_cast %25 : vector<1x256x256xbf16> to vector<256x256xbf16>
    %cst_21 = arith.constant dense<0.000000e+00> : vector<128x256xf32>
    %27 = tpu.matmul %24, %26, %cst_21 {dimension_numbers = #tpu.dot_dimension_numbers<[1], [0], [0], [1], [0, 0, 1, 1], [], []>} : vector<128x256xbf16>, vector<256x256xbf16>, vector<128x256xf32> -> vector<128x256xf32>
    %c1_22 = arith.constant 1 : index
    %c0_23 = arith.constant 0 : index
    %c0_24 = arith.constant 0 : index
    %28 = vector.load %arg7[%c1_22, %c0_23, %c0_24] : memref<2x1x256xf32, #tpu.memory_space<vmem>>, vector<1x1x256xf32>
    %29 = vector.shape_cast %28 : vector<1x1x256xf32> to vector<1x256xf32>
    %30 = vector.broadcast %29 : vector<1x256xf32> to vector<128x256xf32>
    %31 = arith.addf %27, %30 : vector<128x256xf32>
    %cst_25 = arith.constant 0.000000e+00 : f32
    %32 = vector.broadcast %cst_25 : f32 to vector<128x256xf32>
    %33 = arith.maximumf %31, %32 : vector<128x256xf32>
    %34 = arith.truncf %33 : vector<128x256xf32> to vector<128x256xbf16>
    %c0_26 = arith.constant 0 : index
    %c0_27 = arith.constant 0 : index
    %35 = vector.load %arg8[%c0_26, %c0_27] : memref<256x128xbf16, #tpu.memory_space<vmem>>, vector<256x128xbf16>
    %cst_28 = arith.constant dense<0.000000e+00> : vector<128x128xf32>
    %36 = tpu.matmul %34, %35, %cst_28 {dimension_numbers = #tpu.dot_dimension_numbers<[1], [0], [0], [1], [0, 0, 1, 1], [], []>} : vector<128x256xbf16>, vector<256x128xbf16>, vector<128x128xf32> -> vector<128x128xf32>
    %c0_29 = arith.constant 0 : index
    %c0_30 = arith.constant 0 : index
    %37 = vector.load %arg9[%c0_29, %c0_30] : memref<1x128xf32, #tpu.memory_space<vmem>>, vector<1x128xf32>
    %38 = vector.broadcast %37 : vector<1x128xf32> to vector<128x128xf32>
    %39 = arith.addf %36, %38 : vector<128x128xf32>
    %cst_31 = arith.constant 0.000000e+00 : f32
    %40 = vector.broadcast %cst_31 : f32 to vector<128x128xf32>
    %41 = arith.maximumf %39, %40 : vector<128x128xf32>
    %42 = arith.truncf %41 : vector<128x128xf32> to vector<128x128xbf16>
    %c0_32 = arith.constant 0 : index
    %c0_33 = arith.constant 0 : index
    %43 = vector.load %arg10[%c0_32, %c0_33] : memref<128x128xbf16, #tpu.memory_space<vmem>>, vector<128x128xbf16>
    %cst_34 = arith.constant dense<0.000000e+00> : vector<128x128xf32>
    %44 = tpu.matmul %42, %43, %cst_34 {dimension_numbers = #tpu.dot_dimension_numbers<[1], [0], [0], [1], [0, 0, 1, 1], [], []>} : vector<128x128xbf16>, vector<128x128xbf16>, vector<128x128xf32> -> vector<128x128xf32>
    %c0_35 = arith.constant 0 : index
    %c0_36 = arith.constant 0 : index
    %45 = vector.load %arg11[%c0_35, %c0_36] : memref<1x128xf32, #tpu.memory_space<vmem>>, vector<1x128xf32>
    %46 = vector.broadcast %45 : vector<1x128xf32> to vector<128x128xf32>
    %47 = arith.addf %44, %46 : vector<128x128xf32>
    %c0_37 = arith.constant 0 : index
    %c0_38 = arith.constant 0 : index
    %48 = vector.load %arg12[%c0_37, %c0_38] : memref<128x128xf32, #tpu.memory_space<vmem>>, vector<128x128xf32>
    tpu.vector_store %arg12[%c0_37, %c0_38], %47 {strides = array<i32>} : memref<128x128xf32, #tpu.memory_space<vmem>>, vector<128x128xf32>,
    return
  }
  func.func @transform_0(%arg0: i32) -> (i32, i32) {
    %c0_i32 = arith.constant 0 : i32
    %c0_i32_0 = arith.constant 0 : i32
    return %arg0, %c0_i32 : i32, i32
  }
  func.func @transform_1(%arg0: i32) -> (i32, i32) {
    %c0_i32 = arith.constant 0 : i32
    %c0_i32_0 = arith.constant 0 : i32
    %c0_i32_1 = arith.constant 0 : i32
    return %c0_i32, %c0_i32_0 : i32, i32
  }
  func.func @transform_2(%arg0: i32) -> (i32, i32) {
    %c0_i32 = arith.constant 0 : i32
    %c0_i32_0 = arith.constant 0 : i32
    %c0_i32_1 = arith.constant 0 : i32
    return %c0_i32, %c0_i32_0 : i32, i32
  }
  func.func @transform_3(%arg0: i32) -> (i32, i32) {
    %c0_i32 = arith.constant 0 : i32
    %c0_i32_0 = arith.constant 0 : i32
    %c0_i32_1 = arith.constant 0 : i32
    return %c0_i32, %c0_i32_0 : i32, i32
  }
  func.func @transform_4(%arg0: i32) -> (i32, i32) {
    %c0_i32 = arith.constant 0 : i32
    %c0_i32_0 = arith.constant 0 : i32
    %c0_i32_1 = arith.constant 0 : i32
    return %c0_i32, %c0_i32_0 : i32, i32
  }
  func.func @transform_5(%arg0: i32) -> (i32, i32, i32) {
    %c0_i32 = arith.constant 0 : i32
    %c0_i32_0 = arith.constant 0 : i32
    %c0_i32_1 = arith.constant 0 : i32
    %c0_i32_2 = arith.constant 0 : i32
    return %c0_i32, %c0_i32_0, %c0_i32_1 : i32, i32, i32
  }
  func.func @transform_6(%arg0: i32) -> (i32, i32, i32) {
    %c0_i32 = arith.constant 0 : i32
    %c0_i32_0 = arith.constant 0 : i32
    %c0_i32_1 = arith.constant 0 : i32
    %c0_i32_2 = arith.constant 0 : i32
    return %c0_i32, %c0_i32_0, %c0_i32_1 : i32, i32, i32
  }
  func.func @transform_7(%arg0: i32) -> (i32, i32) {
    %c0_i32 = arith.constant 0 : i32
    %c0_i32_0 = arith.constant 0 : i32
    %c0_i32_1 = arith.constant 0 : i32
    return %c0_i32, %c0_i32_0 : i32, i32
  }
  func.func @transform_8(%arg0: i32) -> (i32, i32) {
    %c0_i32 = arith.constant 0 : i32
    %c0_i32_0 = arith.constant 0 : i32
    %c0_i32_1 = arith.constant 0 : i32
    return %c0_i32, %c0_i32_0 : i32, i32
  }
  func.func @transform_9(%arg0: i32) -> (i32, i32) {
    %c0_i32 = arith.constant 0 : i32
    %c0_i32_0 = arith.constant 0 : i32
    %c0_i32_1 = arith.constant 0 : i32
    return %c0_i32, %c0_i32_0 : i32, i32
  }
  func.func @transform_10(%arg0: i32) -> (i32, i32) {
    %c0_i32 = arith.constant 0 : i32
    %c0_i32_0 = arith.constant 0 : i32
    %c0_i32_1 = arith.constant 0 : i32
    return %c0_i32, %c0_i32_0 : i32, i32
  }
  func.func @transform_11(%arg0: i32) -> (i32, i32) {
    %c0_i32 = arith.constant 0 : i32
    %c0_i32_0 = arith.constant 0 : i32
    return %arg0, %c0_i32 : i32, i32
  }
}

</mosaic_0001>

<llo_original>
// kernel: tpu_custom_call.1
$region0: #{tpu_custom_call.1}
  #allocation0 [shape = 'u32[]', space=smem, size = 0x4, offset = 0x4, fixed_abs, tag = 'smem constant byte address 0x4 - core index']
  #allocation1 [shape = 'u32[144,128]{1,0:T(1,128)}', space=vmem, size = 0x12000, scoped, tag = 'internal scratch']
  %s0 = inlined_call_operand.hbm [shape: bf16[256,128], index: 0, kind: input, shape index: {}]
  %s1 = inlined_call_operand.hbm [shape: bf16[128,128], index: 1, kind: input, shape index: {}]
  %s2 = inlined_call_operand.vmem [shape: f32[1,128], index: 2, kind: input, shape index: {}]
  %s3 = inlined_call_operand.hbm [shape: bf16[128,256], index: 3, kind: input, shape index: {}]
  %s4 = inlined_call_operand.vmem [shape: f32[1,256], index: 4, kind: input, shape index: {}]
  %s5 = inlined_call_operand.hbm [shape: bf16[2,256,256], index: 5, kind: input, shape index: {}]
  %s6 = inlined_call_operand.vmem [shape: f32[2,1,256], index: 6, kind: input, shape index: {}]
  %s7 = inlined_call_operand.hbm [shape: bf16[256,128], index: 7, kind: input, shape index: {}]
  %s8 = inlined_call_operand.vmem [shape: f32[1,128], index: 8, kind: input, shape index: {}]
  %s9 = inlined_call_operand.hbm [shape: bf16[128,128], index: 9, kind: input, shape index: {}]
  %s10 = inlined_call_operand.vmem [shape: f32[1,128], index: 10, kind: input, shape index: {}]
  %s11 = inlined_call_operand.hbm [shape: f32[256,128], index: 11, kind: output, shape index: {}]
  %s12 = sld [smem:[#allocation0]]
  $region101: #{tpu_custom_call.1} parent=0
    _
  %s14 = ssub.s32 1, %s12
  %s15 = scalar_select 0, %s14, %s12
  $region1: #{tpu_custom_call.1} parent=0
    #allocation2 [shape = 'u8[65536]{0}', space=vmem, size = 0x10000, scoped, tag = 'input window, operand 0']
    #allocation3 [shape = 's32[2]{0}', space=sflag, size = 0x8, scoped, tag = 'scoped memory for tpu_custom_call.1']
    #allocation4 [shape = 's32[2]{0}', space=sflag, size = 0x8, scoped, tag = 'scoped memory for tpu_custom_call.1']
    #allocation5 [shape = 'u8[32768]{0}', space=vmem, size = 0x8000, scoped, tag = 'input window, operand 1, single buffered']
    #allocation6 [shape = 's32[1]{0}', space=sflag, size = 0x4, scoped, tag = 'scoped memory for tpu_custom_call.1']
    #allocation7 [shape = 'u8[65536]{0}', space=vmem, size = 0x10000, scoped, tag = 'input window, operand 3, single buffered']
    #allocation8 [shape = 'u8[262144]{0}', space=vmem, size = 0x40000, scoped, tag = 'input window, operand 5, single buffered']
    #allocation9 [shape = 's32[1]{0}', space=sflag, size = 0x4, scoped, tag = 'scoped memory for tpu_custom_call.1']
    #allocation10 [shape = 'u8[65536]{0}', space=vmem, size = 0x10000, scoped, tag = 'input window, operand 7, single buffered']
    #allocation11 [shape = 'u8[32768]{0}', space=vmem, size = 0x8000, scoped, tag = 'input window, operand 9, single buffered']
    #allocation12 [shape = 's32[1]{0}', space=sflag, size = 0x4, scoped, tag = 'scoped memory for tpu_custom_call.1']
    #allocation13 [shape = 'u8[131072]{0}', space=vmem, size = 0x20000, scoped, tag = 'output window, operand 0']
    %16 = vsyncpa [#allocation3], 0
    %s17 = scalar_lea.sflag [#allocation3], 1
    %18 = vsyncpa %s17, 0
    %19 = vsyncpa [#allocation6], 0
    %20 = vsyncpa [#allocation9], 0
    %21 = vsyncpa [#allocation12], 0
    %22 = vsyncpa [#allocation4], 0
    %s23 = scalar_lea.sflag [#allocation4], 1
    %24 = vsyncpa %s23, 0
    loop: start=0, step=1, limit=4
    $region2: #{tpu_custom_call.1} parent=1 // loop_pre_header
      _
    $region3: #{tpu_custom_call.1} parent=1 // loop_header
      %s26 = sphi 0, %s30
      %p27 = scmp.ge.s32.totalorder %s26, 4
      %s36 = sphi 0, %s38
      %s39 = sphi 0, %s36
      %s40 = sphi 0, %s39
      %s56 = sphi 0, %s40
      %s60 = sphi 0, %s60
      %s62 = sphi 0, %s60
      %s63 = sphi 0, %s62
      %s77 = sphi 0, %s63
      %s81 = sphi 0, %s81
      %s83 = sphi 0, %s81
      %s84 = sphi 0, %s83
      %s98 = sphi 0, %s84
      %s102 = sphi 0, %s102
      %s104 = sphi 0, %s102
      %s105 = sphi 0, %s104
      %s119 = sphi 0, %s105
      %s123 = sphi 0, %s123
      %s125 = sphi 0, %s123
      %s126 = sphi 0, %s125
      %s140 = sphi 0, %s126
      %s144 = sphi 0, %s144
      %s146 = sphi 0, %s144
      %s147 = sphi 0, %s146
      %s161 = sphi 0, %s147
      %s165 = sphi 0, %s165
      %s167 = sphi 0, %s165
      %s168 = sphi 0, %s167
      %s182 = sphi 0, %s168
      %s186 = sphi 0, %s186
      %s188 = sphi 0, %s186
      %s189 = sphi 0, %s188
      %s203 = sphi 0, %s189
      %s207 = sphi 0, %s207
      %s209 = sphi 0, %s207
      %s210 = sphi 0, %s209
      %s224 = sphi 0, %s210
      %s228 = sphi 0, %s228
      %s230 = sphi 0, %s228
      %s231 = sphi 0, %s230
      %s245 = sphi 0, %s231
      %s249 = sphi 0, %s249
      %s251 = sphi 0, %s249
      %s252 = sphi 0, %s251
      %s266 = sphi 0, %s252
      %s272 = sphi 0, %s274
      %s275 = sphi 0, %s272
      %s276 = sphi 0, %s275
      %s292 = sphi 0, %s276
    $region4: #{tpu_custom_call.1} parent=1 // loop_header_branch
      %29 = sbr.rel (%p27) target = $region8
    $region5: #{tpu_custom_call.1} parent=1 // loop_body
      %s31 = ssub.s32 %s26, 1
      %s32 = ssub.s32 %s26, 2
      %s33 = sadd.s32 %s26, 1
      %s34 = ssub.s32 %s26, %s33
      %p35 = scmp.eq.s32.totalorder %s34, 0
      %s37 = sadd.s32 %s36, 1
      %s38 = scalar_select %p35, %s36, %s37
      %p41 = pneg %p35
      %p42 = scmp.eq.s32.totalorder %s26, 1
      %p43 = por %p41, %p42
      %p44 = scmp.ne.s32.totalorder %s36, %s39
      %p45 = scmp.eq.s32.totalorder %s26, 0
      %p46 = por %p44, %p45
      %p47 = scmp.ne.s32.totalorder %s36, %s39
      %p48 = scmp.eq.s32.totalorder %s31, 1
      %p49 = por %p47, %p48
      %p50 = scmp.ne.s32.totalorder %s39, %s40
      %p51 = scmp.eq.s32.totalorder %s31, 0
      %p52 = por %p50, %p51
      %p53 = scmp.ne.s32.totalorder %s39, %s40
      %p54 = scmp.eq.s32.totalorder %s32, 1
      %p55 = por %p53, %p54
      %p57 = scmp.ne.s32.totalorder %s40, %s56
      %p58 = scmp.eq.s32.totalorder %s32, 0
      %p59 = por %p57, %p58
      %s61 = sadd.s32 %s60, 1
      %p64 = scmp.eq.s32.totalorder %s26, 1
      %p65 = scmp.ne.s32.totalorder %s60, %s62
      %p66 = scmp.eq.s32.totalorder %s26, 0
      %p67 = por %p65, %p66
      %p68 = scmp.ne.s32.totalorder %s60, %s62
      %p69 = scmp.eq.s32.totalorder %s31, 1
      %p70 = por %p68, %p69
      %p71 = scmp.ne.s32.totalorder %s62, %s63
      %p72 = scmp.eq.s32.totalorder %s31, 0
      %p73 = por %p71, %p72
      %p74 = scmp.ne.s32.totalorder %s62, %s63
      %p75 = scmp.eq.s32.totalorder %s32, 1
      %p76 = por %p74, %p75
      %p78 = scmp.ne.s32.totalorder %s63, %s77
      %p79 = scmp.eq.s32.totalorder %s32, 0
      %p80 = por %p78, %p79
      %s82 = sadd.s32 %s81, 1
      %p85 = scmp.eq.s32.totalorder %s26, 1
      %p86 = scmp.ne.s32.totalorder %s81, %s83
      %p87 = scmp.eq.s32.totalorder %s26, 0
      %p88 = por %p86, %p87
      %p89 = scmp.ne.s32.totalorder %s81, %s83
      %p90 = scmp.eq.s32.totalorder %s31, 1
      %p91 = por %p89, %p90
      %p92 = scmp.ne.s32.totalorder %s83, %s84
      %p93 = scmp.eq.s32.totalorder %s31, 0
      %p94 = por %p92, %p93
      %p95 = scmp.ne.s32.totalorder %s83, %s84
      %p96 = scmp.eq.s32.totalorder %s32, 1
      %p97 = por %p95, %p96
      %p99 = scmp.ne.s32.totalorder %s84, %s98
      %p100 = scmp.eq.s32.totalorder %s32, 0
      %p101 = por %p99, %p100
      %s103 = sadd.s32 %s102, 1
      %p106 = scmp.eq.s32.totalorder %s26, 1
      %p107 = scmp.ne.s32.totalorder %s102, %s104
      %p108 = scmp.eq.s32.totalorder %s26, 0
      %p109 = por %p107, %p108
      %p110 = scmp.ne.s32.totalorder %s102, %s104
      %p111 = scmp.eq.s32.totalorder %s31, 1
      %p112 = por %p110, %p111
      %p113 = scmp.ne.s32.totalorder %s104, %s105
      %p114 = scmp.eq.s32.totalorder %s31, 0
      %p115 = por %p113, %p114
      %p116 = scmp.ne.s32.totalorder %s104, %s105
      %p117 = scmp.eq.s32.totalorder %s32, 1
      %p118 = por %p116, %p117
      %p120 = scmp.ne.s32.totalorder %s105, %s119
      %p121 = scmp.eq.s32.totalorder %s32, 0
      %p122 = por %p120, %p121
      %s124 = sadd.s32 %s123, 1
      %p127 = scmp.eq.s32.totalorder %s26, 1
      %p128 = scmp.ne.s32.totalorder %s123, %s125
      %p129 = scmp.eq.s32.totalorder %s26, 0
      %p130 = por %p128, %p129
      %p131 = scmp.ne.s32.totalorder %s123, %s125
      %p132 = scmp.eq.s32.totalorder %s31, 1
      %p133 = por %p131, %p132
      %p134 = scmp.ne.s32.totalorder %s125, %s126
      %p135 = scmp.eq.s32.totalorder %s31, 0
      %p136 = por %p134, %p135
      %p137 = scmp.ne.s32.totalorder %s125, %s126
      %p138 = scmp.eq.s32.totalorder %s32, 1
      %p139 = por %p137, %p138
      %p141 = scmp.ne.s32.totalorder %s126, %s140
      %p142 = scmp.eq.s32.totalorder %s32, 0
      %p143 = por %p141, %p142
      %s145 = sadd.s32 %s144, 1
      %p148 = scmp.eq.s32.totalorder %s26, 1
      %p149 = scmp.ne.s32.totalorder %s144, %s146
      %p150 = scmp.eq.s32.totalorder %s26, 0
      %p151 = por %p149, %p150
      %p152 = scmp.ne.s32.totalorder %s144, %s146
      %p153 = scmp.eq.s32.totalorder %s31, 1
      %p154 = por %p152, %p153
      %p155 = scmp.ne.s32.totalorder %s146, %s147
      %p156 = scmp.eq.s32.totalorder %s31, 0
      %p157 = por %p155, %p156
      %p158 = scmp.ne.s32.totalorder %s146, %s147
      %p159 = scmp.eq.s32.totalorder %s32, 1
      %p160 = por %p158, %p159
      %p162 = scmp.ne.s32.totalorder %s147, %s161
      %p163 = scmp.eq.s32.totalorder %s32, 0
      %p164 = por %p162, %p163
      %s166 = sadd.s32 %s165, 1
      %p169 = scmp.eq.s32.totalorder %s26, 1
      %p170 = scmp.ne.s32.totalorder %s165, %s167
      %p171 = scmp.eq.s32.totalorder %s26, 0
      %p172 = por %p170, %p171
      %p173 = scmp.ne.s32.totalorder %s165, %s167
      %p174 = scmp.eq.s32.totalorder %s31, 1
      %p175 = por %p173, %p174
      %p176 = scmp.ne.s32.totalorder %s167, %s168
      %p177 = scmp.eq.s32.totalorder %s31, 0
      %p178 = por %p176, %p177
      %p179 = scmp.ne.s32.totalorder %s167, %s168
      %p180 = scmp.eq.s32.totalorder %s32, 1
      %p181 = por %p179, %p180
      %p183 = scmp.ne.s32.totalorder %s168, %s182
      %p184 = scmp.eq.s32.totalorder %s32, 0
      %p185 = por %p183, %p184
      %s187 = sadd.s32 %s186, 1
      %p190 = scmp.eq.s32.totalorder %s26, 1
      %p191 = scmp.ne.s32.totalorder %s186, %s188
      %p192 = scmp.eq.s32.totalorder %s26, 0
      %p193 = por %p191, %p192
      %p194 = scmp.ne.s32.totalorder %s186, %s188
      %p195 = scmp.eq.s32.totalorder %s31, 1
      %p196 = por %p194, %p195
      %p197 = scmp.ne.s32.totalorder %s188, %s189
      %p198 = scmp.eq.s32.totalorder %s31, 0
      %p199 = por %p197, %p198
      %p200 = scmp.ne.s32.totalorder %s188, %s189
      %p201 = scmp.eq.s32.totalorder %s32, 1
      %p202 = por %p200, %p201
      %p204 = scmp.ne.s32.totalorder %s189, %s203
      %p205 = scmp.eq.s32.totalorder %s32, 0
      %p206 = por %p204, %p205
      %s208 = sadd.s32 %s207, 1
      %p211 = scmp.eq.s32.totalorder %s26, 1
      %p212 = scmp.ne.s32.totalorder %s207, %s209
      %p213 = scmp.eq.s32.totalorder %s26, 0
      %p214 = por %p212, %p213
      %p215 = scmp.ne.s32.totalorder %s207, %s209
      %p216 = scmp.eq.s32.totalorder %s31, 1
      %p217 = por %p215, %p216
      %p218 = scmp.ne.s32.totalorder %s209, %s210
      %p219 = scmp.eq.s32.totalorder %s31, 0
      %p220 = por %p218, %p219
      %p221 = scmp.ne.s32.totalorder %s209, %s210
      %p222 = scmp.eq.s32.totalorder %s32, 1
      %p223 = por %p221, %p222
      %p225 = scmp.ne.s32.totalorder %s210, %s224
      %p226 = scmp.eq.s32.totalorder %s32, 0
      %p227 = por %p225, %p226
      %s229 = sadd.s32 %s228, 1
      %p232 = scmp.eq.s32.totalorder %s26, 1
      %p233 = scmp.ne.s32.totalorder %s228, %s230
      %p234 = scmp.eq.s32.totalorder %s26, 0
      %p235 = por %p233, %p234
      %p236 = scmp.ne.s32.totalorder %s228, %s230
      %p237 = scmp.eq.s32.totalorder %s31, 1
      %p238 = por %p236, %p237
      %p239 = scmp.ne.s32.totalorder %s230, %s231
      %p240 = scmp.eq.s32.totalorder %s31, 0
      %p241 = por %p239, %p240
      %p242 = scmp.ne.s32.totalorder %s230, %s231
      %p243 = scmp.eq.s32.totalorder %s32, 1
      %p244 = por %p242, %p243
      %p246 = scmp.ne.s32.totalorder %s231, %s245
      %p247 = scmp.eq.s32.totalorder %s32, 0
      %p248 = por %p246, %p247
      %s250 = sadd.s32 %s249, 1
      %p253 = scmp.eq.s32.totalorder %s26, 1
      %p254 = scmp.ne.s32.totalorder %s249, %s251
      %p255 = scmp.eq.s32.totalorder %s26, 0
      %p256 = por %p254, %p255
      %p257 = scmp.ne.s32.totalorder %s249, %s251
      %p258 = scmp.eq.s32.totalorder %s31, 1
      %p259 = por %p257, %p258
      %p260 = scmp.ne.s32.totalorder %s251, %s252
      %p261 = scmp.eq.s32.totalorder %s31, 0
      %p262 = por %p260, %p261
      %p263 = scmp.ne.s32.totalorder %s251, %s252
      %p264 = scmp.eq.s32.totalorder %s32, 1
      %p265 = por %p263, %p264
      %p267 = scmp.ne.s32.totalorder %s252, %s266
      %p268 = scmp.eq.s32.totalorder %s32, 0
      %p269 = por %p267, %p268
      %s270 = ssub.s32 %s26, %s33
      %p271 = scmp.eq.s32.totalorder %s270, 0
      %s273 = sadd.s32 %s272, 1
      %s274 = scalar_select %p271, %s272, %s273
      %p277 = pneg %p271
      %p278 = scmp.eq.s32.totalorder %s26, 1
      %p279 = por %p277, %p278
      %p280 = scmp.ne.s32.totalorder %s272, %s275
      %p281 = scmp.eq.s32.totalorder %s26, 0
      %p282 = por %p280, %p281
      %p283 = scmp.ne.s32.totalorder %s272, %s275
      %p284 = scmp.eq.s32.totalorder %s31, 1
      %p285 = por %p283, %p284
      %p286 = scmp.ne.s32.totalorder %s275, %s276
      %p287 = scmp.eq.s32.totalorder %s31, 0
      %p288 = por %p286, %p287
      %p289 = scmp.ne.s32.totalorder %s275, %s276
      %p290 = scmp.eq.s32.totalorder %s32, 1
      %p291 = por %p289, %p290
      %p293 = scmp.ne.s32.totalorder %s276, %s292
      %p294 = scmp.eq.s32.totalorder %s32, 0
      %p295 = por %p293, %p294
      %p296 = scmp.le.s32.totalorder 1, %s26
      %p297 = scmp.lt.s32.totalorder %s26, 3
      %p298 = pnand %p296, %p297
      %p299 = pneg %p298
      // Predicated region
      $region9: #{tpu_custom_call.1} parent=5 // pred_check
        _
      $region10: #{tpu_custom_call.1} parent=5 // pred_check_branch
        %301 = sbr.rel (%p298) target = $region12
      $region11: #{tpu_custom_call.1} parent=5 // pred_region
        %s302 = ssub.s32 %s26, 1
        // Predicated region
        $region13: #{tpu_custom_call.1} parent=11 // pred_check
          %p303 = pneg %p73
        $region14: #{tpu_custom_call.1} parent=11 // pred_check_branch
          %305 = sbr.rel (%p303) target = $region16
        $region15: #{tpu_custom_call.1} parent=11 // pred_region
          %s307 = ssub.s32 1024, 1024
          %308 = vsyncadd [#allocation6], %s307
          %s309 = sshll.u32 [#allocation5], 4
          %s310 = int_to_ptr.vmem [resolvable:$true] %s309
          %315 = dma.hbm_to_vmem [thread:$0]  %s1, 1024, %s310, [#allocation6], 64, 64, 4
        $region16: #{tpu_custom_call.1} parent=11 // pred_fallthru
          _
        // Predicated region
        $region17: #{tpu_custom_call.1} parent=11 // pred_check
          %p316 = pneg %p94
        $region18: #{tpu_custom_call.1} parent=11 // pred_check_branch
          %318 = sbr.rel (%p316) target = $region20
        $region19: #{tpu_custom_call.1} parent=11 // pred_region
          _
        $region20: #{tpu_custom_call.1} parent=11 // pred_fallthru
          _
        // Predicated region
        $region21: #{tpu_custom_call.1} parent=11 // pred_check
          %p319 = pneg %p115
        $region22: #{tpu_custom_call.1} parent=11 // pred_check_branch
          %321 = sbr.rel (%p319) target = $region24
        $region23: #{tpu_custom_call.1} parent=11 // pred_region
          %s323 = ssub.s32 2048, 2048
          %324 = vsyncadd [#allocation6], %s323
          %s325 = sshll.u32 [#allocation7], 4
          %s326 = int_to_ptr.vmem [resolvable:$true] %s325
          %331 = dma.hbm_to_vmem [thread:$0]  %s3, 2048, %s326, [#allocation6], 128, 128, 8
        $region24: #{tpu_custom_call.1} parent=11 // pred_fallthru
          _
        // Predicated region
        $region25: #{tpu_custom_call.1} parent=11 // pred_check
          %p332 = pneg %p136
        $region26: #{tpu_custom_call.1} parent=11 // pred_check_branch
          %334 = sbr.rel (%p332) target = $region28
        $region27: #{tpu_custom_call.1} parent=11 // pred_region
          _
        $region28: #{tpu_custom_call.1} parent=11 // pred_fallthru
          _
        // Predicated region
        $region29: #{tpu_custom_call.1} parent=11 // pred_check
          %p335 = pneg %p157
        $region30: #{tpu_custom_call.1} parent=11 // pred_check_branch
          %337 = sbr.rel (%p335) target = $region32
        $region31: #{tpu_custom_call.1} parent=11 // pred_region
          %s339 = ssub.s32 8192, 8192
          %340 = vsyncadd [#allocation9], %s339
          %s341 = sshll.u32 [#allocation8], 4
          %s342 = int_to_ptr.vmem [resolvable:$true] %s341
          %347 = dma.hbm_to_vmem [thread:$0]  %s5, 8192, %s342, [#allocation9], 128, 128, 8
        $region32: #{tpu_custom_call.1} parent=11 // pred_fallthru
          _
        // Predicated region
        $region33: #{tpu_custom_call.1} parent=11 // pred_check
          %p348 = pneg %p178
        $region34: #{tpu_custom_call.1} parent=11 // pred_check_branch
          %350 = sbr.rel (%p348) target = $region36
        $region35: #{tpu_custom_call.1} parent=11 // pred_region
          _
        $region36: #{tpu_custom_call.1} parent=11 // pred_fallthru
          _
        // Predicated region
        $region37: #{tpu_custom_call.1} parent=11 // pred_check
          %p351 = pneg %p199
        $region38: #{tpu_custom_call.1} parent=11 // pred_check_branch
          %353 = sbr.rel (%p351) target = $region40
        $region39: #{tpu_custom_call.1} parent=11 // pred_region
          %s355 = ssub.s32 2048, 2048
          %356 = vsyncadd [#allocation9], %s355
          %s357 = sshll.u32 [#allocation10], 4
          %s358 = int_to_ptr.vmem [resolvable:$true] %s357
          %363 = dma.hbm_to_vmem [thread:$0]  %s7, 2048, %s358, [#allocation9], 64, 64, 4
        $region40: #{tpu_custom_call.1} parent=11 // pred_fallthru
          _
        // Predicated region
        $region41: #{tpu_custom_call.1} parent=11 // pred_check
          %p364 = pneg %p220
        $region42: #{tpu_custom_call.1} parent=11 // pred_check_branch
          %366 = sbr.rel (%p364) target = $region44
        $region43: #{tpu_custom_call.1} parent=11 // pred_region
          _
        $region44: #{tpu_custom_call.1} parent=11 // pred_fallthru
          _
        // Predicated region
        $region45: #{tpu_custom_call.1} parent=11 // pred_check
          %p367 = pneg %p241
        $region46: #{tpu_custom_call.1} parent=11 // pred_check_branch
          %369 = sbr.rel (%p367) target = $region48
        $region47: #{tpu_custom_call.1} parent=11 // pred_region
          %s371 = ssub.s32 1024, 1024
          %372 = vsyncadd [#allocation12], %s371
          %s373 = sshll.u32 [#allocation11], 4
          %s374 = int_to_ptr.vmem [resolvable:$true] %s373
          %379 = dma.hbm_to_vmem [thread:$0]  %s9, 1024, %s374, [#allocation12], 64, 64, 4
        $region48: #{tpu_custom_call.1} parent=11 // pred_fallthru
          _
        // Predicated region
        $region49: #{tpu_custom_call.1} parent=11 // pred_check
          %p380 = pneg %p262
        $region50: #{tpu_custom_call.1} parent=11 // pred_check_branch
          %382 = sbr.rel (%p380) target = $region52
        $region51: #{tpu_custom_call.1} parent=11 // pred_region
          _
        $region52: #{tpu_custom_call.1} parent=11 // pred_fallthru
          _
      $region12: #{tpu_custom_call.1} parent=5 // pred_fallthru
        _
      %p383 = scmp.lt.s32.totalorder %s26, 2
      // Predicated region
      $region53: #{tpu_custom_call.1} parent=5 // pred_check
        %p384 = pneg %p383
      $region54: #{tpu_custom_call.1} parent=5 // pred_check_branch
        %386 = sbr.rel (%p384) target = $region56
      $region55: #{tpu_custom_call.1} parent=5 // pred_region
        // Predicated region
        $region57: #{tpu_custom_call.1} parent=55 // pred_check
          %p387 = pneg %p46
        $region58: #{tpu_custom_call.1} parent=55 // pred_check_branch
          %389 = sbr.rel (%p387) target = $region60
        $region59: #{tpu_custom_call.1} parent=55 // pred_region
          %s390 = sand.u32 %s36, 1
          %s391 = scalar_lea.sflag [#allocation3], %s390
          %s392 = sand.u32 %s36, 1
          %s393 = smul.addr %s392, 64
          %s394 = scalar_lea.vmem [#allocation2], %s393
          %s395 = smul.u32 16, %s26
          %s397 = ssub.s32 1024, 1024
          %398 = vsyncadd %s391, %s397
          %s399 = smul.addr %s395, 64
          %s400 = scalar_lea.hbm %s0, %s399
          %s401 = sshll.u32 %s394, 4
          %s402 = int_to_ptr.vmem [resolvable:$true] %s401
          %407 = dma.hbm_to_vmem [thread:$0]  %s400, 1024, %s402, %s391, 64, 64, 4
        $region60: #{tpu_custom_call.1} parent=55 // pred_fallthru
          _
      $region56: #{tpu_custom_call.1} parent=5 // pred_fallthru
        _
      %p408 = scmp.le.s32.totalorder 1, %s26
      %p409 = scmp.lt.s32.totalorder %s26, 3
      %p410 = pnand %p408, %p409
      %p411 = pneg %p410
      // Predicated region
      $region61: #{tpu_custom_call.1} parent=5 // pred_check
        _
      $region62: #{tpu_custom_call.1} parent=5 // pred_check_branch
        %413 = sbr.rel (%p410) target = $region64
      $region63: #{tpu_custom_call.1} parent=5 // pred_region
        %s414 = ssub.s32 %s26, 1
        %s415 = sand.u32 %s39, 1
        %s416 = scalar_lea.sflag [#allocation3], %s415
        %s417 = sand.u32 %s39, 1
        %s418 = smul.addr %s417, 64
        %s419 = scalar_lea.vmem [#allocation2], %s418
        // Predicated region
        $region65: #{tpu_custom_call.1} parent=63 // pred_check
          %p420 = pneg %p52
        $region66: #{tpu_custom_call.1} parent=63 // pred_check_branch
          %422 = sbr.rel (%p420) target = $region68
        $region67: #{tpu_custom_call.1} parent=63 // pred_region
          %423 = dma.done %s416, 1024
        $region68: #{tpu_custom_call.1} parent=63 // pred_fallthru
          _
        // Predicated region
        $region69: #{tpu_custom_call.1} parent=63 // pred_check
          %p424 = pneg %p73
        $region70: #{tpu_custom_call.1} parent=63 // pred_check_branch
          %426 = sbr.rel (%p424) target = $region72
        $region71: #{tpu_custom_call.1} parent=63 // pred_region
          %427 = dma.done [#allocation6], 1024
        $region72: #{tpu_custom_call.1} parent=63 // pred_fallthru
          _
        // Predicated region
        $region73: #{tpu_custom_call.1} parent=63 // pred_check
          %p428 = pneg %p115
        $region74: #{tpu_custom_call.1} parent=63 // pred_check_branch
          %430 = sbr.rel (%p428) target = $region76
        $region75: #{tpu_custom_call.1} parent=63 // pred_region
          %431 = dma.done [#allocation6], 2048
        $region76: #{tpu_custom_call.1} parent=63 // pred_fallthru
          _
        // Predicated region
        $region77: #{tpu_custom_call.1} parent=63 // pred_check
          %p432 = pneg %p157
        $region78: #{tpu_custom_call.1} parent=63 // pred_check_branch
          %434 = sbr.rel (%p432) target = $region80
        $region79: #{tpu_custom_call.1} parent=63 // pred_region
          %435 = dma.done [#allocation9], 8192
        $region80: #{tpu_custom_call.1} parent=63 // pred_fallthru
          _
        // Predicated region
        $region81: #{tpu_custom_call.1} parent=63 // pred_check
          %p436 = pneg %p199
        $region82: #{tpu_custom_call.1} parent=63 // pred_check_branch
          %438 = sbr.rel (%p436) target = $region84
        $region83: #{tpu_custom_call.1} parent=63 // pred_region
          %439 = dma.done [#allocation9], 2048
        $region84: #{tpu_custom_call.1} parent=63 // pred_fallthru
          _
        // Predicated region
        $region85: #{tpu_custom_call.1} parent=63 // pred_check
          %p440 = pneg %p241
        $region86: #{tpu_custom_call.1} parent=63 // pred_check_branch
          %442 = sbr.rel (%p440) target = $region88
        $region87: #{tpu_custom_call.1} parent=63 // pred_region
          %443 = dma.done [#allocation12], 1024
        $region88: #{tpu_custom_call.1} parent=63 // pred_fallthru
          _
        %s444 = sand.u32 %s39, 1
        %s445 = scalar_lea.sflag [#allocation3], %s444
        %s446 = sand.u32 %s39, 1
        %s447 = smul.addr %s446, 64
        %s448 = scalar_lea.vmem [#allocation2], %s447
        %p449 = pneg %p52
        %p450 = pneg %p49
        %p451 = pneg %p73
        %p452 = pneg %p70
        %p453 = pneg %p94
        %p454 = pneg %p91
        %p455 = pneg %p115
        %p456 = pneg %p112
        %p457 = pneg %p136
        %p458 = pneg %p133
        %p459 = pneg %p157
        %p460 = pneg %p154
        %p461 = pneg %p178
        %p462 = pneg %p175
        %p463 = pneg %p199
        %p464 = pneg %p196
        %p465 = pneg %p220
        %p466 = pneg %p217
        %p467 = pneg %p241
        %p468 = pneg %p238
        %p469 = pneg %p262
        %p470 = pneg %p259
        %p471 = pneg %p288
        %p472 = pneg %p285
        %s473 = sand.u32 %s275, 1
        %s474 = scalar_lea.sflag [#allocation4], %s473
        %s475 = sand.u32 %s275, 1
        %s476 = smul.addr %s475, 128
        %s477 = scalar_lea.vmem [#allocation13], %s476
        %s478 = smul.u32 16, %s31
        %s479 = smul.u32 16, %s31
        %v481 = vld [vmem:[%s419] sm:$0xf]
        %v482 = vld [vmem:[%s419 + $0x4] sm:$0xf]
        %v483 = vld [vmem:[%s419 + $0x8] sm:$0xf]
        %v484 = vld [vmem:[%s419 + $0xc] sm:$0xf]
        %v485 = vld [vmem:[%s419 + $0x10] sm:$0xf]
        %v486 = vld [vmem:[%s419 + $0x14] sm:$0xf]
        %v487 = vld [vmem:[%s419 + $0x18] sm:$0xf]
        %v488 = vld [vmem:[%s419 + $0x1c] sm:$0xf]
        %v489 = vld [vmem:[%s419 + $0x20] sm:$0xf]
        %v490 = vld [vmem:[%s419 + $0x24] sm:$0xf]
        %v491 = vld [vmem:[%s419 + $0x28] sm:$0xf]
        %v492 = vld [vmem:[%s419 + $0x2c] sm:$0xf]
        %v493 = vld [vmem:[%s419 + $0x30] sm:$0xf]
        %v494 = vld [vmem:[%s419 + $0x34] sm:$0xf]
        %v495 = vld [vmem:[%s419 + $0x38] sm:$0xf]
        %v496 = vld [vmem:[%s419 + $0x3c] sm:$0xf]
        %v497 = vld [vmem:[#allocation5] sm:$0xf]
        %v498 = vld [vmem:[#allocation5 + $0x4] sm:$0xf]
        %v499 = vld [vmem:[#allocation5 + $0x8] sm:$0xf]
        %v500 = vld [vmem:[#allocation5 + $0xc] sm:$0xf]
        %v501 = vld [vmem:[#allocation5 + $0x10] sm:$0xf]
        %v502 = vld [vmem:[#allocation5 + $0x14] sm:$0xf]
        %v503 = vld [vmem:[#allocation5 + $0x18] sm:$0xf]
        %v504 = vld [vmem:[#allocation5 + $0x1c] sm:$0xf]
        %v505 = vld [vmem:[#allocation5 + $0x20] sm:$0xf]
        %v506 = vld [vmem:[#allocation5 + $0x24] sm:$0xf]
        %v507 = vld [vmem:[#allocation5 + $0x28] sm:$0xf]
        %v508 = vld [vmem:[#allocation5 + $0x2c] sm:$0xf]
        %v509 = vld [vmem:[#allocation5 + $0x30] sm:$0xf]
        %v510 = vld [vmem:[#allocation5 + $0x34] sm:$0xf]
        %v511 = vld [vmem:[#allocation5 + $0x38] sm:$0xf]
        %v512 = vld [vmem:[#allocation5 + $0x3c] sm:$0xf]
        %v513 = vld [vmem:[%s2] sm:$0x1]
        %v515 = vlaneseq
        %v516 = vshrl.u32 %v515, 7
        %v517 = vsub.s32 0, %v516
        %v518 = vrot.slane %v513, %v517
        %v536 = vunpack.c.l.b16 %v481
        %v537 = vunpack.c.l.b16 %v482
        %v538 = vunpack.c.l.b16 %v483
        %v539 = vunpack.c.l.b16 %v484
        %v540 = vunpack.c.l.b16 %v485
        %v541 = vunpack.c.l.b16 %v486
        %v542 = vunpack.c.l.b16 %v487
        %v543 = vunpack.c.l.b16 %v488
        %v544 = vunpack.c.l.b16 %v489
        %v545 = vunpack.c.l.b16 %v490
        %v546 = vunpack.c.l.b16 %v491
        %v547 = vunpack.c.l.b16 %v492
        %v548 = vunpack.c.l.b16 %v493
        %v549 = vunpack.c.l.b16 %v494
        %v550 = vunpack.c.l.b16 %v495
        %v551 = vunpack.c.l.b16 %v496
        %v552 = vpack.c.b16 %v537, %v536
        %v553 = vpack.c.b16 %v539, %v538
        %v554 = vpack.c.b16 %v541, %v540
        %v555 = vpack.c.b16 %v543, %v542
        %v556 = vpack.c.b16 %v545, %v544
        %v557 = vpack.c.b16 %v547, %v546
        %v558 = vpack.c.b16 %v549, %v548
        %v559 = vpack.c.b16 %v551, %v550
        %v584 = vunpack.c.l.b16 %v497
        %v585 = vunpack.c.l.b16 %v498
        %v586 = vunpack.c.l.b16 %v499
        %v587 = vunpack.c.l.b16 %v500
        %v588 = vunpack.c.l.b16 %v501
        %v589 = vunpack.c.l.b16 %v502
        %v590 = vunpack.c.l.b16 %v503
        %v591 = vunpack.c.l.b16 %v504
        %v592 = vunpack.c.l.b16 %v505
        %v593 = vunpack.c.l.b16 %v506
        %v594 = vunpack.c.l.b16 %v507
        %v595 = vunpack.c.l.b16 %v508
        %v596 = vunpack.c.l.b16 %v509
        %v597 = vunpack.c.l.b16 %v510
        %v598 = vunpack.c.l.b16 %v511
        %v599 = vunpack.c.l.b16 %v512
        %v600 = vpack.c.b16 %v585, %v584
        %v601 = vpack.c.b16 %v587, %v586
        %v602 = vpack.c.b16 %v589, %v588
        %v603 = vpack.c.b16 %v591, %v590
        %v604 = vpack.c.b16 %v593, %v592
        %v605 = vpack.c.b16 %v595, %v594
        %v606 = vpack.c.b16 %v597, %v596
        %v607 = vpack.c.b16 %v599, %v598
        %616 = vmatprep.subr.bf16.mxu0 0
        %617 = vmatpush1.bf16.msra.mxu0 %v600
        %618 = vmatprep.subr.bf16.mxu0 0
        %619 = vmatpush1.bf16.msra.mxu0 %v601
        %620 = vmatprep.subr.bf16.mxu0 0
        %621 = vmatpush1.bf16.msra.mxu0 %v602
        %622 = vmatprep.subr.bf16.mxu0 0
        %623 = vmatpush1.bf16.msra.mxu0 %v603
        %624 = vmatprep.subr.bf16.mxu0 0
        %625 = vmatpush1.bf16.msra.mxu0 %v604
        %626 = vmatprep.subr.bf16.mxu0 0
        %627 = vmatpush1.bf16.msra.mxu0 %v605
        %628 = vmatprep.subr.bf16.mxu0 0
        %629 = vmatpush1.bf16.msra.mxu0 %v606
        %630 = vmatprep.subr.bf16.mxu0 0
        %631 = vmatpush1.bf16.msra.mxu0 %v607
        %632 = vmatprep.subr.bf16.mxu0 0
        %633 = vmatpush1.bf16.msra.mxu0 0
        %634 = vmatprep.subr.bf16.mxu0 0
        %635 = vmatpush1.bf16.msra.mxu0 0
        %636 = vmatprep.subr.bf16.mxu0 0
        %637 = vmatpush1.bf16.msra.mxu0 0
        %638 = vmatprep.subr.bf16.mxu0 0
        %639 = vmatpush1.bf16.msra.mxu0 0
        %640 = vmatprep.subr.bf16.mxu0 0
        %641 = vmatpush1.bf16.msra.mxu0 0
        %642 = vmatprep.subr.bf16.mxu0 0
        %643 = vmatpush1.bf16.msra.mxu0 0
        %644 = vmatprep.subr.bf16.mxu0 0
        %645 = vmatpush1.bf16.msra.mxu0 0
        %646 = vmatprep.subr.bf16.mxu0 0
        %647 = vmatpush1.bf16.msra.mxu0 0
        %648 = vmatprep.mubr.bf16.mxu0 0
        %649 = vmatmul.mubr.bf16.gmra.mrb[0].mxu0 %v552
        %v650 = vpop.f32.mrb[0].mxu0
        %v651 = vadd.f32 %v518, %v650
        %v652 = vpop.f32.mrb[0].mxu0
        %v653 = vpop.f32.mrb[0].mxu0
        %v654 = vadd.f32 %v518, %v653
        %v655 = vpop.f32.mrb[0].mxu0
        %656 = vmatprep.mubr.bf16.mxu0 0
        %657 = vmatmul.mubr.bf16.gmra.mrb[0].mxu0 %v553
        %v658 = vpop.f32.mrb[0].mxu0
        %v659 = vadd.f32 %v518, %v658
        %v660 = vpop.f32.mrb[0].mxu0
        %v661 = vpop.f32.mrb[0].mxu0
        %v662 = vadd.f32 %v518, %v661
        %v663 = vpop.f32.mrb[0].mxu0
        %664 = vmatprep.mubr.bf16.mxu0 0
        %665 = vmatmul.mubr.bf16.gmra.mrb[0].mxu0 %v554
        %v666 = vpop.f32.mrb[0].mxu0
        %v667 = vadd.f32 %v518, %v666
        %v668 = vpop.f32.mrb[0].mxu0
        %v669 = vpop.f32.mrb[0].mxu0
        %v670 = vadd.f32 %v518, %v669
        %v671 = vpop.f32.mrb[0].mxu0
        %672 = vmatprep.mubr.bf16.mxu0 0
        %673 = vmatmul.mubr.bf16.gmra.mrb[0].mxu0 %v555
        %v674 = vpop.f32.mrb[0].mxu0
        %v675 = vadd.f32 %v518, %v674
        %v676 = vpop.f32.mrb[0].mxu0
        %v677 = vpop.f32.mrb[0].mxu0
        %v678 = vadd.f32 %v518, %v677
        %v679 = vpop.f32.mrb[0].mxu0
        %680 = vmatprep.mubr.bf16.mxu0 0
        %681 = vmatmul.mubr.bf16.gmra.mrb[0].mxu0 %v556
        %v682 = vpop.f32.mrb[0].mxu0
        %v683 = vadd.f32 %v518, %v682
        %v684 = vpop.f32.mrb[0].mxu0
        %v685 = vpop.f32.mrb[0].mxu0
        %v686 = vadd.f32 %v518, %v685
        %v687 = vpop.f32.mrb[0].mxu0
        %688 = vmatprep.mubr.bf16.mxu0 0
        %689 = vmatmul.mubr.bf16.gmra.mrb[0].mxu0 %v557
        %v690 = vpop.f32.mrb[0].mxu0
        %v691 = vadd.f32 %v518, %v690
        %v692 = vpop.f32.mrb[0].mxu0
        %v693 = vpop.f32.mrb[0].mxu0
        %v694 = vadd.f32 %v518, %v693
        %v695 = vpop.f32.mrb[0].mxu0
        %696 = vmatprep.mubr.bf16.mxu0 0
        %697 = vmatmul.mubr.bf16.gmra.mrb[0].mxu0 %v558
        %v698 = vpop.f32.mrb[0].mxu0
        %v699 = vadd.f32 %v518, %v698
        %v700 = vpop.f32.mrb[0].mxu0
        %v701 = vpop.f32.mrb[0].mxu0
        %v702 = vadd.f32 %v518, %v701
        %v703 = vpop.f32.mrb[0].mxu0
        %704 = vmatprep.mubr.bf16.mxu0 0
        %705 = vmatmul.mubr.bf16.gmra.mrb[0].mxu0 %v559
        %v706 = vpop.f32.mrb[0].mxu0
        %v707 = vadd.f32 %v518, %v706
        %v708 = vpop.f32.mrb[0].mxu0
        %v709 = vpop.f32.mrb[0].mxu0
        %v710 = vadd.f32 %v518, %v709
        %v711 = vpop.f32.mrb[0].mxu0
        %712 = vdwg.mxu0
        %v713 = vmax.f32 %v651, 0.0
        %v714 = vmax.f32 %v654, 0.0
        %v715 = vmax.f32 %v659, 0.0
        %v716 = vmax.f32 %v662, 0.0
        %v717 = vmax.f32 %v667, 0.0
        %v718 = vmax.f32 %v670, 0.0
        %v719 = vmax.f32 %v675, 0.0
        %v720 = vmax.f32 %v678, 0.0
        %v721 = vmax.f32 %v683, 0.0
        %v722 = vmax.f32 %v686, 0.0
        %v723 = vmax.f32 %v691, 0.0
        %v724 = vmax.f32 %v694, 0.0
        %v725 = vmax.f32 %v699, 0.0
        %v726 = vmax.f32 %v702, 0.0
        %v727 = vmax.f32 %v707, 0.0
        %v728 = vmax.f32 %v710, 0.0
        %v729 = vpack.c.bf16 %v714, %v713
        %v730 = vpack.c.bf16 %v716, %v715
        %v731 = vpack.c.bf16 %v718, %v717
        %v732 = vpack.c.bf16 %v720, %v719
        %v733 = vpack.c.bf16 %v722, %v721
        %v734 = vpack.c.bf16 %v724, %v723
        %v735 = vpack.c.bf16 %v726, %v725
        %v736 = vpack.c.bf16 %v728, %v727
        %v737 = vld [vmem:[#allocation7] sm:$0xff]
        %v738 = vld [vmem:[#allocation7 + $0x8] sm:$0xff]
        %v739 = vld [vmem:[#allocation7 + $0x10] sm:$0xff]
        %v740 = vld [vmem:[#allocation7 + $0x18] sm:$0xff]
        %v741 = vld [vmem:[#allocation7 + $0x20] sm:$0xff]
        %v742 = vld [vmem:[#allocation7 + $0x28] sm:$0xff]
        %v743 = vld [vmem:[#allocation7 + $0x30] sm:$0xff]
        %v744 = vld [vmem:[#allocation7 + $0x38] sm:$0xff]
        %v745 = vld [vmem:[#allocation7 + $0x40] sm:$0xff]
        %v746 = vld [vmem:[#allocation7 + $0x48] sm:$0xff]
        %v747 = vld [vmem:[#allocation7 + $0x50] sm:$0xff]
        %v748 = vld [vmem:[#allocation7 + $0x58] sm:$0xff]
        %v749 = vld [vmem:[#allocation7 + $0x60] sm:$0xff]
        %v750 = vld [vmem:[#allocation7 + $0x68] sm:$0xff]
        %v751 = vld [vmem:[#allocation7 + $0x70] sm:$0xff]
        %v752 = vld [vmem:[#allocation7 + $0x78] sm:$0xff]
        %v753 = vld [vmem:[%s4] sm:$0x3]
        %v755 = vlaneseq
        %v756 = vshrl.u32 %v755, 7
        %v757 = vsub.s32 0, %v756
        %v758 = vrot.slane %v753, %v757
        %v759 = vlaneseq
        %v760 = vshrl.u32 %v759, 7
        %v761 = vsub.s32 1, %v760
        %v762 = vrot.slane %v753, %v761
        %v781 = vunpack.c.l.b16 %v737
        %v782 = vunpack.c.h.b16 %v737
        %v783 = vunpack.c.l.b16 %v738
        %v784 = vunpack.c.h.b16 %v738
        %v785 = vunpack.c.l.b16 %v739
        %v786 = vunpack.c.h.b16 %v739
        %v787 = vunpack.c.l.b16 %v740
        %v788 = vunpack.c.h.b16 %v740
        %v789 = vunpack.c.l.b16 %v741
        %v790 = vunpack.c.h.b16 %v741
        %v791 = vunpack.c.l.b16 %v742
        %v792 = vunpack.c.h.b16 %v742
        %v793 = vunpack.c.l.b16 %v743
        %v794 = vunpack.c.h.b16 %v743
        %v795 = vunpack.c.l.b16 %v744
        %v796 = vunpack.c.h.b16 %v744
        %v797 = vunpack.c.l.b16 %v745
        %v798 = vunpack.c.h.b16 %v745
        %v799 = vunpack.c.l.b16 %v746
        %v800 = vunpack.c.h.b16 %v746
        %v801 = vunpack.c.l.b16 %v747
        %v802 = vunpack.c.h.b16 %v747
        %v803 = vunpack.c.l.b16 %v748
        %v804 = vunpack.c.h.b16 %v748
        %v805 = vunpack.c.l.b16 %v749
        %v806 = vunpack.c.h.b16 %v749
        %v807 = vunpack.c.l.b16 %v750
        %v808 = vunpack.c.h.b16 %v750
        %v809 = vunpack.c.l.b16 %v751
        %v810 = vunpack.c.h.b16 %v751
        %v811 = vunpack.c.l.b16 %v752
        %v812 = vunpack.c.h.b16 %v752
        %v813 = vpack.c.b16 %v783, %v781
        %v814 = vpack.c.b16 %v784, %v782
        %v815 = vpack.c.b16 %v787, %v785
        %v816 = vpack.c.b16 %v788, %v786
        %v817 = vpack.c.b16 %v791, %v789
        %v818 = vpack.c.b16 %v792, %v790
        %v819 = vpack.c.b16 %v795, %v793
        %v820 = vpack.c.b16 %v796, %v794
        %v821 = vpack.c.b16 %v799, %v797
        %v822 = vpack.c.b16 %v800, %v798
        %v823 = vpack.c.b16 %v803, %v801
        %v824 = vpack.c.b16 %v804, %v802
        %v825 = vpack.c.b16 %v807, %v805
        %v826 = vpack.c.b16 %v808, %v806
        %v827 = vpack.c.b16 %v811, %v809
        %v828 = vpack.c.b16 %v812, %v810
        %845 = vmatprep.subr.bf16.mxu0 %v814
        %846 = vmatpush1.bf16.msra.mxu0 %v813
        %847 = vmatprep.subr.bf16.mxu0 %v816
        %848 = vmatpush1.bf16.msra.mxu0 %v815
        %849 = vmatprep.subr.bf16.mxu0 %v818
        %850 = vmatpush1.bf16.msra.mxu0 %v817
        %851 = vmatprep.subr.bf16.mxu0 %v820
        %852 = vmatpush1.bf16.msra.mxu0 %v819
        %853 = vmatprep.subr.bf16.mxu0 %v822
        %854 = vmatpush1.bf16.msra.mxu0 %v821
        %855 = vmatprep.subr.bf16.mxu0 %v824
        %856 = vmatpush1.bf16.msra.mxu0 %v823
        %857 = vmatprep.subr.bf16.mxu0 %v826
        %858 = vmatpush1.bf16.msra.mxu0 %v825
        %859 = vmatprep.subr.bf16.mxu0 %v828
        %860 = vmatpush1.bf16.msra.mxu0 %v827
        %861 = vmatprep.subr.bf16.mxu0 0
        %862 = vmatpush1.bf16.msra.mxu0 0
        %863 = vmatprep.subr.bf16.mxu0 0
        %864 = vmatpush1.bf16.msra.mxu0 0
        %865 = vmatprep.subr.bf16.mxu0 0
        %866 = vmatpush1.bf16.msra.mxu0 0
        %867 = vmatprep.subr.bf16.mxu0 0
        %868 = vmatpush1.bf16.msra.mxu0 0
        %869 = vmatprep.subr.bf16.mxu0 0
        %870 = vmatpush1.bf16.msra.mxu0 0
        %871 = vmatprep.subr.bf16.mxu0 0
        %872 = vmatpush1.bf16.msra.mxu0 0
        %873 = vmatprep.subr.bf16.mxu0 0
        %874 = vmatpush1.bf16.msra.mxu0 0
        %875 = vmatprep.subr.bf16.mxu0 0
        %876 = vmatpush1.bf16.msra.mxu0 0
        %877 = vmatprep.mubr.bf16.mxu0 0
        %878 = vmatmul.mubr.bf16.gmra.mrb[0].mxu0 %v729
        %v879 = vpop.f32.mrb[0].mxu0
        %v880 = vadd.f32 %v758, %v879
        %v881 = vpop.f32.mrb[0].mxu0
        %v882 = vadd.f32 %v762, %v881
        %v883 = vpop.f32.mrb[0].mxu0
        %v884 = vadd.f32 %v758, %v883
        %v885 = vpop.f32.mrb[0].mxu0
        %v886 = vadd.f32 %v762, %v885
        %887 = vmatprep.mubr.bf16.mxu0 0
        %888 = vmatmul.mubr.bf16.gmra.mrb[0].mxu0 %v730
        %v889 = vpop.f32.mrb[0].mxu0
        %v890 = vadd.f32 %v758, %v889
        %v891 = vpop.f32.mrb[0].mxu0
        %v892 = vadd.f32 %v762, %v891
        %v893 = vpop.f32.mrb[0].mxu0
        %v894 = vadd.f32 %v758, %v893
        %v895 = vpop.f32.mrb[0].mxu0
        %v896 = vadd.f32 %v762, %v895
        %897 = vmatprep.mubr.bf16.mxu0 0
        %898 = vmatmul.mubr.bf16.gmra.mrb[0].mxu0 %v731
        %v899 = vpop.f32.mrb[0].mxu0
        %v900 = vadd.f32 %v758, %v899
        %v901 = vpop.f32.mrb[0].mxu0
        %v902 = vadd.f32 %v762, %v901
        %v903 = vpop.f32.mrb[0].mxu0
        %v904 = vadd.f32 %v758, %v903
        %v905 = vpop.f32.mrb[0].mxu0
        %v906 = vadd.f32 %v762, %v905
        %907 = vmatprep.mubr.bf16.mxu0 0
        %908 = vmatmul.mubr.bf16.gmra.mrb[0].mxu0 %v732
        %v909 = vpop.f32.mrb[0].mxu0
        %v910 = vadd.f32 %v758, %v909
        %v911 = vpop.f32.mrb[0].mxu0
        %v912 = vadd.f32 %v762, %v911
        %v913 = vpop.f32.mrb[0].mxu0
        %v914 = vadd.f32 %v758, %v913
        %v915 = vpop.f32.mrb[0].mxu0
        %v916 = vadd.f32 %v762, %v915
        %917 = vmatprep.mubr.bf16.mxu0 0
        %918 = vmatmul.mubr.bf16.gmra.mrb[0].mxu0 %v733
        %v919 = vpop.f32.mrb[0].mxu0
        %v920 = vadd.f32 %v758, %v919
        %v921 = vpop.f32.mrb[0].mxu0
        %v922 = vadd.f32 %v762, %v921
        %v923 = vpop.f32.mrb[0].mxu0
        %v924 = vadd.f32 %v758, %v923
        %v925 = vpop.f32.mrb[0].mxu0
        %v926 = vadd.f32 %v762, %v925
        %927 = vmatprep.mubr.bf16.mxu0 0
        %928 = vmatmul.mubr.bf16.gmra.mrb[0].mxu0 %v734
        %v929 = vpop.f32.mrb[0].mxu0
        %v930 = vadd.f32 %v758, %v929
        %v931 = vpop.f32.mrb[0].mxu0
        %v932 = vadd.f32 %v762, %v931
        %v933 = vpop.f32.mrb[0].mxu0
        %v934 = vadd.f32 %v758, %v933
        %v935 = vpop.f32.mrb[0].mxu0
        %v936 = vadd.f32 %v762, %v935
        %937 = vmatprep.mubr.bf16.mxu0 0
        %938 = vmatmul.mubr.bf16.gmra.mrb[0].mxu0 %v735
        %v939 = vpop.f32.mrb[0].mxu0
        %v940 = vadd.f32 %v758, %v939
        %v941 = vpop.f32.mrb[0].mxu0
        %v942 = vadd.f32 %v762, %v941
        %v943 = vpop.f32.mrb[0].mxu0
        %v944 = vadd.f32 %v758, %v943
        %v945 = vpop.f32.mrb[0].mxu0
        %v946 = vadd.f32 %v762, %v945
        %947 = vmatprep.mubr.bf16.mxu0 0
        %948 = vmatmul.mubr.bf16.gmra.mrb[0].mxu0 %v736
        %v949 = vpop.f32.mrb[0].mxu0
        %v950 = vadd.f32 %v758, %v949
        %v951 = vpop.f32.mrb[0].mxu0
        %v952 = vadd.f32 %v762, %v951
        %v953 = vpop.f32.mrb[0].mxu0
        %v954 = vadd.f32 %v758, %v953
        %v955 = vpop.f32.mrb[0].mxu0
        %v956 = vadd.f32 %v762, %v955
        %957 = vdwg.mxu0
        %v958 = vmax.f32 %v880, 0.0
        %v959 = vmax.f32 %v882, 0.0
        %v960 = vmax.f32 %v884, 0.0
        %v961 = vmax.f32 %v886, 0.0
        %v962 = vmax.f32 %v890, 0.0
        %v963 = vmax.f32 %v892, 0.0
        %v964 = vmax.f32 %v894, 0.0
        %v965 = vmax.f32 %v896, 0.0
        %v966 = vmax.f32 %v900, 0.0
        %v967 = vmax.f32 %v902, 0.0
        %v968 = vmax.f32 %v904, 0.0
        %v969 = vmax.f32 %v906, 0.0
        %v970 = vmax.f32 %v910, 0.0
        %v971 = vmax.f32 %v912, 0.0
        %v972 = vmax.f32 %v914, 0.0
        %v973 = vmax.f32 %v916, 0.0
        %v974 = vmax.f32 %v920, 0.0
        %v975 = vmax.f32 %v922, 0.0
        %v976 = vmax.f32 %v924, 0.0
        %v977 = vmax.f32 %v926, 0.0
        %v978 = vmax.f32 %v930, 0.0
        %v979 = vmax.f32 %v932, 0.0
        %v980 = vmax.f32 %v934, 0.0
        %v981 = vmax.f32 %v936, 0.0
        %v982 = vmax.f32 %v940, 0.0
        %v983 = vmax.f32 %v942, 0.0
        %v984 = vmax.f32 %v944, 0.0
        %v985 = vmax.f32 %v946, 0.0
        %v986 = vmax.f32 %v950, 0.0
        %v987 = vmax.f32 %v952, 0.0
        %v988 = vmax.f32 %v954, 0.0
        %v989 = vmax.f32 %v956, 0.0
        %v990 = vpack.c.bf16 %v960, %v958
        %v991 = vpack.c.bf16 %v961, %v959
        %v992 = vpack.c.bf16 %v964, %v962
        %v993 = vpack.c.bf16 %v965, %v963
        %v994 = vpack.c.bf16 %v968, %v966
        %v995 = vpack.c.bf16 %v969, %v967
        %v996 = vpack.c.bf16 %v972, %v970
        %v997 = vpack.c.bf16 %v973, %v971
        %v998 = vpack.c.bf16 %v976, %v974
        %v999 = vpack.c.bf16 %v977, %v975
        %v1000 = vpack.c.bf16 %v980, %v978
        %v1001 = vpack.c.bf16 %v981, %v979
        %v1002 = vpack.c.bf16 %v984, %v982
        %v1003 = vpack.c.bf16 %v985, %v983
        %v1004 = vpack.c.bf16 %v988, %v986
        %v1005 = vpack.c.bf16 %v989, %v987
        %v1006 = vld [vmem:[#allocation8] sm:$0xff]
        %v1007 = vld [vmem:[#allocation8 + $0x8] sm:$0xff]
        %v1008 = vld [vmem:[#allocation8 + $0x10] sm:$0xff]
        %v1009 = vld [vmem:[#allocation8 + $0x18] sm:$0xff]
        %v1010 = vld [vmem:[#allocation8 + $0x20] sm:$0xff]
        %v1011 = vld [vmem:[#allocation8 + $0x28] sm:$0xff]
        %v1012 = vld [vmem:[#allocation8 + $0x30] sm:$0xff]
        %v1013 = vld [vmem:[#allocation8 + $0x38] sm:$0xff]
        %v1014 = vld [vmem:[#allocation8 + $0x40] sm:$0xff]
        %v1015 = vld [vmem:[#allocation8 + $0x48] sm:$0xff]
        %v1016 = vld [vmem:[#allocation8 + $0x50] sm:$0xff]
        %v1017 = vld [vmem:[#allocation8 + $0x58] sm:$0xff]
        %v1018 = vld [vmem:[#allocation8 + $0x60] sm:$0xff]
        %v1019 = vld [vmem:[#allocation8 + $0x68] sm:$0xff]
        %v1020 = vld [vmem:[#allocation8 + $0x70] sm:$0xff]
        %v1021 = vld [vmem:[#allocation8 + $0x78] sm:$0xff]
        %v1022 = vld [vmem:[#allocation8 + $0x80] sm:$0xff]
        %v1023 = vld [vmem:[#allocation8 + $0x88] sm:$0xff]
        %v1024 = vld [vmem:[#allocation8 + $0x90] sm:$0xff]
        %v1025 = vld [vmem:[#allocation8 + $0x98] sm:$0xff]
        %v1026 = vld [vmem:[#allocation8 + $0xa0] sm:$0xff]
        %v1027 = vld [vmem:[#allocation8 + $0xa8] sm:$0xff]
        %v1028 = vld [vmem:[#allocation8 + $0xb0] sm:$0xff]
        %v1029 = vld [vmem:[#allocation8 + $0xb8] sm:$0xff]
        %v1030 = vld [vmem:[#allocation8 + $0xc0] sm:$0xff]
        %v1031 = vld [vmem:[#allocation8 + $0xc8] sm:$0xff]
        %v1032 = vld [vmem:[#allocation8 + $0xd0] sm:$0xff]
        %v1033 = vld [vmem:[#allocation8 + $0xd8] sm:$0xff]
        %v1034 = vld [vmem:[#allocation8 + $0xe0] sm:$0xff]
        %v1035 = vld [vmem:[#allocation8 + $0xe8] sm:$0xff]
        %v1036 = vld [vmem:[#allocation8 + $0xf0] sm:$0xff]
        %v1037 = vld [vmem:[#allocation8 + $0xf8] sm:$0xff]
        %v1038 = vld [vmem:[%s6] sm:$0x3]
        %v1040 = vlaneseq
        %v1041 = vshrl.u32 %v1040, 7
        %v1042 = vsub.s32 0, %v1041
        %v1043 = vrot.slane %v1038, %v1042
        %v1044 = vlaneseq
        %v1045 = vshrl.u32 %v1044, 7
        %v1046 = vsub.s32 1, %v1045
        %v1047 = vrot.slane %v1038, %v1046
        %v1082 = vunpack.c.l.b16 %v1006
        %v1083 = vunpack.c.h.b16 %v1006
        %v1084 = vunpack.c.l.b16 %v1007
        %v1085 = vunpack.c.h.b16 %v1007
        %v1086 = vunpack.c.l.b16 %v1008
        %v1087 = vunpack.c.h.b16 %v1008
        %v1088 = vunpack.c.l.b16 %v1009
        %v1089 = vunpack.c.h.b16 %v1009
        %v1090 = vunpack.c.l.b16 %v1010
        %v1091 = vunpack.c.h.b16 %v1010
        %v1092 = vunpack.c.l.b16 %v1011
        %v1093 = vunpack.c.h.b16 %v1011
        %v1094 = vunpack.c.l.b16 %v1012
        %v1095 = vunpack.c.h.b16 %v1012
        %v1096 = vunpack.c.l.b16 %v1013
        %v1097 = vunpack.c.h.b16 %v1013
        %v1098 = vunpack.c.l.b16 %v1014
        %v1099 = vunpack.c.h.b16 %v1014
        %v1100 = vunpack.c.l.b16 %v1015
        %v1101 = vunpack.c.h.b16 %v1015
        %v1102 = vunpack.c.l.b16 %v1016
        %v1103 = vunpack.c.h.b16 %v1016
        %v1104 = vunpack.c.l.b16 %v1017
        %v1105 = vunpack.c.h.b16 %v1017
        %v1106 = vunpack.c.l.b16 %v1018
        %v1107 = vunpack.c.h.b16 %v1018
        %v1108 = vunpack.c.l.b16 %v1019
        %v1109 = vunpack.c.h.b16 %v1019
        %v1110 = vunpack.c.l.b16 %v1020
        %v1111 = vunpack.c.h.b16 %v1020
        %v1112 = vunpack.c.l.b16 %v1021
        %v1113 = vunpack.c.h.b16 %v1021
        %v1114 = vunpack.c.l.b16 %v1022
        %v1115 = vunpack.c.h.b16 %v1022
        %v1116 = vunpack.c.l.b16 %v1023
        %v1117 = vunpack.c.h.b16 %v1023
        %v1118 = vunpack.c.l.b16 %v1024
        %v1119 = vunpack.c.h.b16 %v1024
        %v1120 = vunpack.c.l.b16 %v1025
        %v1121 = vunpack.c.h.b16 %v1025
        %v1122 = vunpack.c.l.b16 %v1026
        %v1123 = vunpack.c.h.b16 %v1026
        %v1124 = vunpack.c.l.b16 %v1027
        %v1125 = vunpack.c.h.b16 %v1027
        %v1126 = vunpack.c.l.b16 %v1028
        %v1127 = vunpack.c.h.b16 %v1028
        %v1128 = vunpack.c.l.b16 %v1029
        %v1129 = vunpack.c.h.b16 %v1029
        %v1130 = vunpack.c.l.b16 %v1030
        %v1131 = vunpack.c.h.b16 %v1030
        %v1132 = vunpack.c.l.b16 %v1031
        %v1133 = vunpack.c.h.b16 %v1031
        %v1134 = vunpack.c.l.b16 %v1032
        %v1135 = vunpack.c.h.b16 %v1032
        %v1136 = vunpack.c.l.b16 %v1033
        %v1137 = vunpack.c.h.b16 %v1033
        %v1138 = vunpack.c.l.b16 %v1034
        %v1139 = vunpack.c.h.b16 %v1034
        %v1140 = vunpack.c.l.b16 %v1035
        %v1141 = vunpack.c.h.b16 %v1035
        %v1142 = vunpack.c.l.b16 %v1036
        %v1143 = vunpack.c.h.b16 %v1036
        %v1144 = vunpack.c.l.b16 %v1037
        %v1145 = vunpack.c.h.b16 %v1037
        %v1146 = vpack.c.b16 %v1084, %v1082
        %v1147 = vpack.c.b16 %v1085, %v1083
        %v1148 = vpack.c.b16 %v1088, %v1086
        %v1149 = vpack.c.b16 %v1089, %v1087
        %v1150 = vpack.c.b16 %v1092, %v1090
        %v1151 = vpack.c.b16 %v1093, %v1091
        %v1152 = vpack.c.b16 %v1096, %v1094
        %v1153 = vpack.c.b16 %v1097, %v1095
        %v1154 = vpack.c.b16 %v1100, %v1098
        %v1155 = vpack.c.b16 %v1101, %v1099
        %v1156 = vpack.c.b16 %v1104, %v1102
        %v1157 = vpack.c.b16 %v1105, %v1103
        %v1158 = vpack.c.b16 %v1108, %v1106
        %v1159 = vpack.c.b16 %v1109, %v1107
        %v1160 = vpack.c.b16 %v1112, %v1110
        %v1161 = vpack.c.b16 %v1113, %v1111
        %v1162 = vpack.c.b16 %v1116, %v1114
        %v1163 = vpack.c.b16 %v1117, %v1115
        %v1164 = vpack.c.b16 %v1120, %v1118
        %v1165 = vpack.c.b16 %v1121, %v1119
        %v1166 = vpack.c.b16 %v1124, %v1122
        %v1167 = vpack.c.b16 %v1125, %v1123
        %v1168 = vpack.c.b16 %v1128, %v1126
        %v1169 = vpack.c.b16 %v1129, %v1127
        %v1170 = vpack.c.b16 %v1132, %v1130
        %v1171 = vpack.c.b16 %v1133, %v1131
        %v1172 = vpack.c.b16 %v1136, %v1134
        %v1173 = vpack.c.b16 %v1137, %v1135
        %v1174 = vpack.c.b16 %v1140, %v1138
        %v1175 = vpack.c.b16 %v1141, %v1139
        %v1176 = vpack.c.b16 %v1144, %v1142
        %v1177 = vpack.c.b16 %v1145, %v1143
        %1210 = vmatprep.subr.bf16.mxu0 %v1147
        %1211 = vmatpush1.bf16.msra.mxu0 %v1146
        %1212 = vmatprep.subr.bf16.mxu0 %v1149
        %1213 = vmatpush1.bf16.msra.mxu0 %v1148
        %1214 = vmatprep.subr.bf16.mxu0 %v1151
        %1215 = vmatpush1.bf16.msra.mxu0 %v1150
        %1216 = vmatprep.subr.bf16.mxu0 %v1153
        %1217 = vmatpush1.bf16.msra.mxu0 %v1152
        %1218 = vmatprep.subr.bf16.mxu0 %v1155
        %1219 = vmatpush1.bf16.msra.mxu0 %v1154
        %1220 = vmatprep.subr.bf16.mxu0 %v1157
        %1221 = vmatpush1.bf16.msra.mxu0 %v1156
        %1222 = vmatprep.subr.bf16.mxu0 %v1159
        %1223 = vmatpush1.bf16.msra.mxu0 %v1158
        %1224 = vmatprep.subr.bf16.mxu0 %v1161
        %1225 = vmatpush1.bf16.msra.mxu0 %v1160
        %1226 = vmatprep.subr.bf16.mxu0 %v1163
        %1227 = vmatpush1.bf16.msra.mxu0 %v1162
        %1228 = vmatprep.subr.bf16.mxu0 %v1165
        %1229 = vmatpush1.bf16.msra.mxu0 %v1164
        %1230 = vmatprep.subr.bf16.mxu0 %v1167
        %1231 = vmatpush1.bf16.msra.mxu0 %v1166
        %1232 = vmatprep.subr.bf16.mxu0 %v1169
        %1233 = vmatpush1.bf16.msra.mxu0 %v1168
        %1234 = vmatprep.subr.bf16.mxu0 %v1171
        %1235 = vmatpush1.bf16.msra.mxu0 %v1170
        %1236 = vmatprep.subr.bf16.mxu0 %v1173
        %1237 = vmatpush1.bf16.msra.mxu0 %v1172
        %1238 = vmatprep.subr.bf16.mxu0 %v1175
        %1239 = vmatpush1.bf16.msra.mxu0 %v1174
        %1240 = vmatprep.subr.bf16.mxu0 %v1177
        %1241 = vmatpush1.bf16.msra.mxu0 %v1176
        %1242 = vmatprep.mubr.bf16.mxu0 %v991
        %1243 = vmatmul.mubr.bf16.gmra.mrb[0].mxu0 %v990
        %v1244 = vpop.f32.mrb[0].mxu0
        %v1245 = vadd.f32 %v1043, %v1244
        %v1246 = vpop.f32.mrb[0].mxu0
        %v1247 = vadd.f32 %v1047, %v1246
        %v1248 = vpop.f32.mrb[0].mxu0
        %v1249 = vadd.f32 %v1043, %v1248
        %v1250 = vpop.f32.mrb[0].mxu0
        %v1251 = vadd.f32 %v1047, %v1250
        %1252 = vmatprep.mubr.bf16.mxu0 %v993
        %1253 = vmatmul.mubr.bf16.gmra.mrb[0].mxu0 %v992
        %v1254 = vpop.f32.mrb[0].mxu0
        %v1255 = vadd.f32 %v1043, %v1254
        %v1256 = vpop.f32.mrb[0].mxu0
        %v1257 = vadd.f32 %v1047, %v1256
        %v1258 = vpop.f32.mrb[0].mxu0
        %v1259 = vadd.f32 %v1043, %v1258
        %v1260 = vpop.f32.mrb[0].mxu0
        %v1261 = vadd.f32 %v1047, %v1260
        %1262 = vmatprep.mubr.bf16.mxu0 %v995
        %1263 = vmatmul.mubr.bf16.gmra.mrb[0].mxu0 %v994
        %v1264 = vpop.f32.mrb[0].mxu0
        %v1265 = vadd.f32 %v1043, %v1264
        %v1266 = vpop.f32.mrb[0].mxu0
        %v1267 = vadd.f32 %v1047, %v1266
        %v1268 = vpop.f32.mrb[0].mxu0
        %v1269 = vadd.f32 %v1043, %v1268
        %v1270 = vpop.f32.mrb[0].mxu0
        %v1271 = vadd.f32 %v1047, %v1270
        %1272 = vmatprep.mubr.bf16.mxu0 %v997
        %1273 = vmatmul.mubr.bf16.gmra.mrb[0].mxu0 %v996
        %v1274 = vpop.f32.mrb[0].mxu0
        %v1275 = vadd.f32 %v1043, %v1274
        %v1276 = vpop.f32.mrb[0].mxu0
        %v1277 = vadd.f32 %v1047, %v1276
        %v1278 = vpop.f32.mrb[0].mxu0
        %v1279 = vadd.f32 %v1043, %v1278
        %v1280 = vpop.f32.mrb[0].mxu0
        %v1281 = vadd.f32 %v1047, %v1280
        %1282 = vmatprep.mubr.bf16.mxu0 %v999
        %1283 = vmatmul.mubr.bf16.gmra.mrb[0].mxu0 %v998
        %v1284 = vpop.f32.mrb[0].mxu0
        %v1285 = vadd.f32 %v1043, %v1284
        %v1286 = vpop.f32.mrb[0].mxu0
        %v1287 = vadd.f32 %v1047, %v1286
        %v1288 = vpop.f32.mrb[0].mxu0
        %v1289 = vadd.f32 %v1043, %v1288
        %v1290 = vpop.f32.mrb[0].mxu0
        %v1291 = vadd.f32 %v1047, %v1290
        %1292 = vmatprep.mubr.bf16.mxu0 %v1001
        %1293 = vmatmul.mubr.bf16.gmra.mrb[0].mxu0 %v1000
        %v1294 = vpop.f32.mrb[0].mxu0
        %v1295 = vadd.f32 %v1043, %v1294
        %v1296 = vpop.f32.mrb[0].mxu0
        %v1297 = vadd.f32 %v1047, %v1296
        %v1298 = vpop.f32.mrb[0].mxu0
        %v1299 = vadd.f32 %v1043, %v1298
        %v1300 = vpop.f32.mrb[0].mxu0
        %v1301 = vadd.f32 %v1047, %v1300
        %1302 = vmatprep.mubr.bf16.mxu0 %v1003
        %1303 = vmatmul.mubr.bf16.gmra.mrb[0].mxu0 %v1002
        %v1304 = vpop.f32.mrb[0].mxu0
        %v1305 = vadd.f32 %v1043, %v1304
        %v1306 = vpop.f32.mrb[0].mxu0
        %v1307 = vadd.f32 %v1047, %v1306
        %v1308 = vpop.f32.mrb[0].mxu0
        %v1309 = vadd.f32 %v1043, %v1308
        %v1310 = vpop.f32.mrb[0].mxu0
        %v1311 = vadd.f32 %v1047, %v1310
        %1312 = vmatprep.mubr.bf16.mxu0 %v1005
        %1313 = vmatmul.mubr.bf16.gmra.mrb[0].mxu0 %v1004
        %v1314 = vpop.f32.mrb[0].mxu0
        %v1315 = vadd.f32 %v1043, %v1314
        %v1316 = vpop.f32.mrb[0].mxu0
        %v1317 = vadd.f32 %v1047, %v1316
        %v1318 = vpop.f32.mrb[0].mxu0
        %v1319 = vadd.f32 %v1043, %v1318
        %v1320 = vpop.f32.mrb[0].mxu0
        %v1321 = vadd.f32 %v1047, %v1320
        %1322 = vdwg.mxu0
        %v1323 = vpack.c.bf16 %v1249, %v1245
        %v1324 = vpack.c.bf16 %v1251, %v1247
        %v1325 = vpack.c.bf16 %v1259, %v1255
        %v1326 = vpack.c.bf16 %v1261, %v1257
        %v1327 = vpack.c.bf16 %v1269, %v1265
        %v1328 = vpack.c.bf16 %v1271, %v1267
        %v1329 = vpack.c.bf16 %v1279, %v1275
        %v1330 = vpack.c.bf16 %v1281, %v1277
        %v1331 = vpack.c.bf16 %v1289, %v1285
        %v1332 = vpack.c.bf16 %v1291, %v1287
        %v1333 = vpack.c.bf16 %v1299, %v1295
        %v1334 = vpack.c.bf16 %v1301, %v1297
        %v1335 = vpack.c.bf16 %v1309, %v1305
        %v1336 = vpack.c.bf16 %v1311, %v1307
        %v1337 = vpack.c.bf16 %v1319, %v1315
        %v1338 = vpack.c.bf16 %v1321, %v1317
        %s1339 = scalar_lea.vmem [#allocation8], 256
        %v1340 = vld [vmem:[%s1339] sm:$0xff]
        %v1341 = vld [vmem:[%s1339 + $0x8] sm:$0xff]
        %v1342 = vld [vmem:[%s1339 + $0x10] sm:$0xff]
        %v1343 = vld [vmem:[%s1339 + $0x18] sm:$0xff]
        %v1344 = vld [vmem:[%s1339 + $0x20] sm:$0xff]
        %v1345 = vld [vmem:[%s1339 + $0x28] sm:$0xff]
        %v1346 = vld [vmem:[%s1339 + $0x30] sm:$0xff]
        %v1347 = vld [vmem:[%s1339 + $0x38] sm:$0xff]
        %v1348 = vld [vmem:[%s1339 + $0x40] sm:$0xff]
        %v1349 = vld [vmem:[%s1339 + $0x48] sm:$0xff]
        %v1350 = vld [vmem:[%s1339 + $0x50] sm:$0xff]
        %v1351 = vld [vmem:[%s1339 + $0x58] sm:$0xff]
        %v1352 = vld [vmem:[%s1339 + $0x60] sm:$0xff]
        %v1353 = vld [vmem:[%s1339 + $0x68] sm:$0xff]
        %v1354 = vld [vmem:[%s1339 + $0x70] sm:$0xff]
        %v1355 = vld [vmem:[%s1339 + $0x78] sm:$0xff]
        %v1356 = vld [vmem:[%s1339 + $0x80] sm:$0xff]
        %v1357 = vld [vmem:[%s1339 + $0x88] sm:$0xff]
        %v1358 = vld [vmem:[%s1339 + $0x90] sm:$0xff]
        %v1359 = vld [vmem:[%s1339 + $0x98] sm:$0xff]
        %v1360 = vld [vmem:[%s1339 + $0xa0] sm:$0xff]
        %v1361 = vld [vmem:[%s1339 + $0xa8] sm:$0xff]
        %v1362 = vld [vmem:[%s1339 + $0xb0] sm:$0xff]
        %v1363 = vld [vmem:[%s1339 + $0xb8] sm:$0xff]
        %v1364 = vld [vmem:[%s1339 + $0xc0] sm:$0xff]
        %v1365 = vld [vmem:[%s1339 + $0xc8] sm:$0xff]
        %v1366 = vld [vmem:[%s1339 + $0xd0] sm:$0xff]
        %v1367 = vld [vmem:[%s1339 + $0xd8] sm:$0xff]
        %v1368 = vld [vmem:[%s1339 + $0xe0] sm:$0xff]
        %v1369 = vld [vmem:[%s1339 + $0xe8] sm:$0xff]
        %v1370 = vld [vmem:[%s1339 + $0xf0] sm:$0xff]
        %v1371 = vld [vmem:[%s1339 + $0xf8] sm:$0xff]
        %s1372 = scalar_lea.vmem %s6, 2
        %v1373 = vld [vmem:[%s1372] sm:$0x3]
        %v1375 = vlaneseq
        %v1376 = vshrl.u32 %v1375, 7
        %v1377 = vsub.s32 0, %v1376
        %v1378 = vrot.slane %v1373, %v1377
        %v1379 = vlaneseq
        %v1380 = vshrl.u32 %v1379, 7
        %v1381 = vsub.s32 1, %v1380
        %v1382 = vrot.slane %v1373, %v1381
        %v1417 = vunpack.c.l.b16 %v1340
        %v1418 = vunpack.c.h.b16 %v1340
        %v1419 = vunpack.c.l.b16 %v1341
        %v1420 = vunpack.c.h.b16 %v1341
        %v1421 = vunpack.c.l.b16 %v1342
        %v1422 = vunpack.c.h.b16 %v1342
        %v1423 = vunpack.c.l.b16 %v1343
        %v1424 = vunpack.c.h.b16 %v1343
        %v1425 = vunpack.c.l.b16 %v1344
        %v1426 = vunpack.c.h.b16 %v1344
        %v1427 = vunpack.c.l.b16 %v1345
        %v1428 = vunpack.c.h.b16 %v1345
        %v1429 = vunpack.c.l.b16 %v1346
        %v1430 = vunpack.c.h.b16 %v1346
        %v1431 = vunpack.c.l.b16 %v1347
        %v1432 = vunpack.c.h.b16 %v1347
        %v1433 = vunpack.c.l.b16 %v1348
        %v1434 = vunpack.c.h.b16 %v1348
        %v1435 = vunpack.c.l.b16 %v1349
        %v1436 = vunpack.c.h.b16 %v1349
        %v1437 = vunpack.c.l.b16 %v1350
        %v1438 = vunpack.c.h.b16 %v1350
        %v1439 = vunpack.c.l.b16 %v1351
        %v1440 = vunpack.c.h.b16 %v1351
        %v1441 = vunpack.c.l.b16 %v1352
        %v1442 = vunpack.c.h.b16 %v1352
        %v1443 = vunpack.c.l.b16 %v1353
        %v1444 = vunpack.c.h.b16 %v1353
        %v1445 = vunpack.c.l.b16 %v1354
        %v1446 = vunpack.c.h.b16 %v1354
        %v1447 = vunpack.c.l.b16 %v1355
        %v1448 = vunpack.c.h.b16 %v1355
        %v1449 = vunpack.c.l.b16 %v1356
        %v1450 = vunpack.c.h.b16 %v1356
        %v1451 = vunpack.c.l.b16 %v1357
        %v1452 = vunpack.c.h.b16 %v1357
        %v1453 = vunpack.c.l.b16 %v1358
        %v1454 = vunpack.c.h.b16 %v1358
        %v1455 = vunpack.c.l.b16 %v1359
        %v1456 = vunpack.c.h.b16 %v1359
        %v1457 = vunpack.c.l.b16 %v1360
        %v1458 = vunpack.c.h.b16 %v1360
        %v1459 = vunpack.c.l.b16 %v1361
        %v1460 = vunpack.c.h.b16 %v1361
        %v1461 = vunpack.c.l.b16 %v1362
        %v1462 = vunpack.c.h.b16 %v1362
        %v1463 = vunpack.c.l.b16 %v1363
        %v1464 = vunpack.c.h.b16 %v1363
        %v1465 = vunpack.c.l.b16 %v1364
        %v1466 = vunpack.c.h.b16 %v1364
        %v1467 = vunpack.c.l.b16 %v1365
        %v1468 = vunpack.c.h.b16 %v1365
        %v1469 = vunpack.c.l.b16 %v1366
        %v1470 = vunpack.c.h.b16 %v1366
        %v1471 = vunpack.c.l.b16 %v1367
        %v1472 = vunpack.c.h.b16 %v1367
        %v1473 = vunpack.c.l.b16 %v1368
        %v1474 = vunpack.c.h.b16 %v1368
        %v1475 = vunpack.c.l.b16 %v1369
        %v1476 = vunpack.c.h.b16 %v1369
        %v1477 = vunpack.c.l.b16 %v1370
        %v1478 = vunpack.c.h.b16 %v1370
        %v1479 = vunpack.c.l.b16 %v1371
        %v1480 = vunpack.c.h.b16 %v1371
        %v1481 = vpack.c.b16 %v1419, %v1417
        %v1482 = vpack.c.b16 %v1420, %v1418
        %v1483 = vpack.c.b16 %v1423, %v1421
        %v1484 = vpack.c.b16 %v1424, %v1422
        %v1485 = vpack.c.b16 %v1427, %v1425
        %v1486 = vpack.c.b16 %v1428, %v1426
        %v1487 = vpack.c.b16 %v1431, %v1429
        %v1488 = vpack.c.b16 %v1432, %v1430
        %v1489 = vpack.c.b16 %v1435, %v1433
        %v1490 = vpack.c.b16 %v1436, %v1434
        %v1491 = vpack.c.b16 %v1439, %v1437
        %v1492 = vpack.c.b16 %v1440, %v1438
        %v1493 = vpack.c.b16 %v1443, %v1441
        %v1494 = vpack.c.b16 %v1444, %v1442
        %v1495 = vpack.c.b16 %v1447, %v1445
        %v1496 = vpack.c.b16 %v1448, %v1446
        %v1497 = vpack.c.b16 %v1451, %v1449
        %v1498 = vpack.c.b16 %v1452, %v1450
        %v1499 = vpack.c.b16 %v1455, %v1453
        %v1500 = vpack.c.b16 %v1456, %v1454
        %v1501 = vpack.c.b16 %v1459, %v1457
        %v1502 = vpack.c.b16 %v1460, %v1458
        %v1503 = vpack.c.b16 %v1463, %v1461
        %v1504 = vpack.c.b16 %v1464, %v1462
        %v1505 = vpack.c.b16 %v1467, %v1465
        %v1506 = vpack.c.b16 %v1468, %v1466
        %v1507 = vpack.c.b16 %v1471, %v1469
        %v1508 = vpack.c.b16 %v1472, %v1470
        %v1509 = vpack.c.b16 %v1475, %v1473
        %v1510 = vpack.c.b16 %v1476, %v1474
        %v1511 = vpack.c.b16 %v1479, %v1477
        %v1512 = vpack.c.b16 %v1480, %v1478
        %1545 = vmatprep.subr.bf16.mxu0 %v1482
        %1546 = vmatpush1.bf16.msra.mxu0 %v1481
        %1547 = vmatprep.subr.bf16.mxu0 %v1484
        %1548 = vmatpush1.bf16.msra.mxu0 %v1483
        %1549 = vmatprep.subr.bf16.mxu0 %v1486
        %1550 = vmatpush1.bf16.msra.mxu0 %v1485
        %1551 = vmatprep.subr.bf16.mxu0 %v1488
        %1552 = vmatpush1.bf16.msra.mxu0 %v1487
        %1553 = vmatprep.subr.bf16.mxu0 %v1490
        %1554 = vmatpush1.bf16.msra.mxu0 %v1489
        %1555 = vmatprep.subr.bf16.mxu0 %v1492
        %1556 = vmatpush1.bf16.msra.mxu0 %v1491
        %1557 = vmatprep.subr.bf16.mxu0 %v1494
        %1558 = vmatpush1.bf16.msra.mxu0 %v1493
        %1559 = vmatprep.subr.bf16.mxu0 %v1496
        %1560 = vmatpush1.bf16.msra.mxu0 %v1495
        %1561 = vmatprep.subr.bf16.mxu0 %v1498
        %1562 = vmatpush1.bf16.msra.mxu0 %v1497
        %1563 = vmatprep.subr.bf16.mxu0 %v1500
        %1564 = vmatpush1.bf16.msra.mxu0 %v1499
        %1565 = vmatprep.subr.bf16.mxu0 %v1502
        %1566 = vmatpush1.bf16.msra.mxu0 %v1501
        %1567 = vmatprep.subr.bf16.mxu0 %v1504
        %1568 = vmatpush1.bf16.msra.mxu0 %v1503
        %1569 = vmatprep.subr.bf16.mxu0 %v1506
        %1570 = vmatpush1.bf16.msra.mxu0 %v1505
        %1571 = vmatprep.subr.bf16.mxu0 %v1508
        %1572 = vmatpush1.bf16.msra.mxu0 %v1507
        %1573 = vmatprep.subr.bf16.mxu0 %v1510
        %1574 = vmatpush1.bf16.msra.mxu0 %v1509
        %1575 = vmatprep.subr.bf16.mxu0 %v1512
        %1576 = vmatpush1.bf16.msra.mxu0 %v1511
        %1577 = vmatprep.mubr.bf16.mxu0 %v1324
        %1578 = vmatmul.mubr.bf16.gmra.mrb[0].mxu0 %v1323
        %v1579 = vpop.f32.mrb[0].mxu0
        %v1580 = vadd.f32 %v1378, %v1579
        %v1581 = vpop.f32.mrb[0].mxu0
        %v1582 = vadd.f32 %v1382, %v1581
        %v1583 = vpop.f32.mrb[0].mxu0
        %v1584 = vadd.f32 %v1378, %v1583
        %v1585 = vpop.f32.mrb[0].mxu0
        %v1586 = vadd.f32 %v1382, %v1585
        %1587 = vmatprep.mubr.bf16.mxu0 %v1326
        %1588 = vmatmul.mubr.bf16.gmra.mrb[0].mxu0 %v1325
        %v1589 = vpop.f32.mrb[0].mxu0
        %v1590 = vadd.f32 %v1378, %v1589
        %v1591 = vpop.f32.mrb[0].mxu0
        %v1592 = vadd.f32 %v1382, %v1591
        %v1593 = vpop.f32.mrb[0].mxu0
        %v1594 = vadd.f32 %v1378, %v1593
        %v1595 = vpop.f32.mrb[0].mxu0
        %v1596 = vadd.f32 %v1382, %v1595
        %1597 = vmatprep.mubr.bf16.mxu0 %v1328
        %1598 = vmatmul.mubr.bf16.gmra.mrb[0].mxu0 %v1327
        %v1599 = vpop.f32.mrb[0].mxu0
        %v1600 = vadd.f32 %v1378, %v1599
        %v1601 = vpop.f32.mrb[0].mxu0
        %v1602 = vadd.f32 %v1382, %v1601
        %v1603 = vpop.f32.mrb[0].mxu0
        %v1604 = vadd.f32 %v1378, %v1603
        %v1605 = vpop.f32.mrb[0].mxu0
        %v1606 = vadd.f32 %v1382, %v1605
        %1607 = vmatprep.mubr.bf16.mxu0 %v1330
        %1608 = vmatmul.mubr.bf16.gmra.mrb[0].mxu0 %v1329
        %v1609 = vpop.f32.mrb[0].mxu0
        %v1610 = vadd.f32 %v1378, %v1609
        %v1611 = vpop.f32.mrb[0].mxu0
        %v1612 = vadd.f32 %v1382, %v1611
        %v1613 = vpop.f32.mrb[0].mxu0
        %v1614 = vadd.f32 %v1378, %v1613
        %v1615 = vpop.f32.mrb[0].mxu0
        %v1616 = vadd.f32 %v1382, %v1615
        %1617 = vmatprep.mubr.bf16.mxu0 %v1332
        %1618 = vmatmul.mubr.bf16.gmra.mrb[0].mxu0 %v1331
        %v1619 = vpop.f32.mrb[0].mxu0
        %v1620 = vadd.f32 %v1378, %v1619
        %v1621 = vpop.f32.mrb[0].mxu0
        %v1622 = vadd.f32 %v1382, %v1621
        %v1623 = vpop.f32.mrb[0].mxu0
        %v1624 = vadd.f32 %v1378, %v1623
        %v1625 = vpop.f32.mrb[0].mxu0
        %v1626 = vadd.f32 %v1382, %v1625
        %1627 = vmatprep.mubr.bf16.mxu0 %v1334
        %1628 = vmatmul.mubr.bf16.gmra.mrb[0].mxu0 %v1333
        %v1629 = vpop.f32.mrb[0].mxu0
        %v1630 = vadd.f32 %v1378, %v1629
        %v1631 = vpop.f32.mrb[0].mxu0
        %v1632 = vadd.f32 %v1382, %v1631
        %v1633 = vpop.f32.mrb[0].mxu0
        %v1634 = vadd.f32 %v1378, %v1633
        %v1635 = vpop.f32.mrb[0].mxu0
        %v1636 = vadd.f32 %v1382, %v1635
        %1637 = vmatprep.mubr.bf16.mxu0 %v1336
        %1638 = vmatmul.mubr.bf16.gmra.mrb[0].mxu0 %v1335
        %v1639 = vpop.f32.mrb[0].mxu0
        %v1640 = vadd.f32 %v1378, %v1639
        %v1641 = vpop.f32.mrb[0].mxu0
        %v1642 = vadd.f32 %v1382, %v1641
        %v1643 = vpop.f32.mrb[0].mxu0
        %v1644 = vadd.f32 %v1378, %v1643
        %v1645 = vpop.f32.mrb[0].mxu0
        %v1646 = vadd.f32 %v1382, %v1645
        %1647 = vmatprep.mubr.bf16.mxu0 %v1338
        %1648 = vmatmul.mubr.bf16.gmra.mrb[0].mxu0 %v1337
        %v1649 = vpop.f32.mrb[0].mxu0
        %v1650 = vadd.f32 %v1378, %v1649
        %v1651 = vpop.f32.mrb[0].mxu0
        %v1652 = vadd.f32 %v1382, %v1651
        %v1653 = vpop.f32.mrb[0].mxu0
        %v1654 = vadd.f32 %v1378, %v1653
        %v1655 = vpop.f32.mrb[0].mxu0
        %v1656 = vadd.f32 %v1382, %v1655
        %1657 = vdwg.mxu0
        %v1658 = vmax.f32 %v1580, 0.0
        %v1659 = vmax.f32 %v1582, 0.0
        %v1660 = vmax.f32 %v1584, 0.0
        %v1661 = vmax.f32 %v1586, 0.0
        %v1662 = vmax.f32 %v1590, 0.0
        %v1663 = vmax.f32 %v1592, 0.0
        %v1664 = vmax.f32 %v1594, 0.0
        %v1665 = vmax.f32 %v1596, 0.0
        %v1666 = vmax.f32 %v1600, 0.0
        %v1667 = vmax.f32 %v1602, 0.0
        %v1668 = vmax.f32 %v1604, 0.0
        %v1669 = vmax.f32 %v1606, 0.0
        %v1670 = vmax.f32 %v1610, 0.0
        %v1671 = vmax.f32 %v1612, 0.0
        %v1672 = vmax.f32 %v1614, 0.0
        %v1673 = vmax.f32 %v1616, 0.0
        %v1674 = vmax.f32 %v1620, 0.0
        %v1675 = vmax.f32 %v1622, 0.0
        %v1676 = vmax.f32 %v1624, 0.0
        %v1677 = vmax.f32 %v1626, 0.0
        %v1678 = vmax.f32 %v1630, 0.0
        %v1679 = vmax.f32 %v1632, 0.0
        %v1680 = vmax.f32 %v1634, 0.0
        %v1681 = vmax.f32 %v1636, 0.0
        %v1682 = vmax.f32 %v1640, 0.0
        %v1683 = vmax.f32 %v1642, 0.0
        %v1684 = vmax.f32 %v1644, 0.0
        %v1685 = vmax.f32 %v1646, 0.0
        %v1686 = vmax.f32 %v1650, 0.0
        %v1687 = vmax.f32 %v1652, 0.0
        %v1688 = vmax.f32 %v1654, 0.0
        %v1689 = vmax.f32 %v1656, 0.0
        %v1690 = vpack.c.bf16 %v1660, %v1658
        %v1691 = vpack.c.bf16 %v1661, %v1659
        %v1692 = vpack.c.bf16 %v1664, %v1662
        %v1693 = vpack.c.bf16 %v1665, %v1663
        %v1694 = vpack.c.bf16 %v1668, %v1666
        %v1695 = vpack.c.bf16 %v1669, %v1667
        %v1696 = vpack.c.bf16 %v1672, %v1670
        %v1697 = vpack.c.bf16 %v1673, %v1671
        %v1698 = vpack.c.bf16 %v1676, %v1674
        %v1699 = vpack.c.bf16 %v1677, %v1675
        %v1700 = vpack.c.bf16 %v1680, %v1678
        %v1701 = vpack.c.bf16 %v1681, %v1679
        %v1702 = vpack.c.bf16 %v1684, %v1682
        %v1703 = vpack.c.bf16 %v1685, %v1683
        %v1704 = vpack.c.bf16 %v1688, %v1686
        %v1705 = vpack.c.bf16 %v1689, %v1687
        %v1706 = vld [vmem:[#allocation10] sm:$0xf]
        %v1707 = vld [vmem:[#allocation10 + $0x4] sm:$0xf]
        %v1708 = vld [vmem:[#allocation10 + $0x8] sm:$0xf]
        %v1709 = vld [vmem:[#allocation10 + $0xc] sm:$0xf]
        %v1710 = vld [vmem:[#allocation10 + $0x10] sm:$0xf]
        %v1711 = vld [vmem:[#allocation10 + $0x14] sm:$0xf]
        %v1712 = vld [vmem:[#allocation10 + $0x18] sm:$0xf]
        %v1713 = vld [vmem:[#allocation10 + $0x1c] sm:$0xf]
        %v1714 = vld [vmem:[#allocation10 + $0x20] sm:$0xf]
        %v1715 = vld [vmem:[#allocation10 + $0x24] sm:$0xf]
        %v1716 = vld [vmem:[#allocation10 + $0x28] sm:$0xf]
        %v1717 = vld [vmem:[#allocation10 + $0x2c] sm:$0xf]
        %v1718 = vld [vmem:[#allocation10 + $0x30] sm:$0xf]
        %v1719 = vld [vmem:[#allocation10 + $0x34] sm:$0xf]
        %v1720 = vld [vmem:[#allocation10 + $0x38] sm:$0xf]
        %v1721 = vld [vmem:[#allocation10 + $0x3c] sm:$0xf]
        %v1722 = vld [vmem:[#allocation10 + $0x40] sm:$0xf]
        %v1723 = vld [vmem:[#allocation10 + $0x44] sm:$0xf]
        %v1724 = vld [vmem:[#allocation10 + $0x48] sm:$0xf]
        %v1725 = vld [vmem:[#allocation10 + $0x4c] sm:$0xf]
        %v1726 = vld [vmem:[#allocation10 + $0x50] sm:$0xf]
        %v1727 = vld [vmem:[#allocation10 + $0x54] sm:$0xf]
        %v1728 = vld [vmem:[#allocation10 + $0x58] sm:$0xf]
        %v1729 = vld [vmem:[#allocation10 + $0x5c] sm:$0xf]
        %v1730 = vld [vmem:[#allocation10 + $0x60] sm:$0xf]
        %v1731 = vld [vmem:[#allocation10 + $0x64] sm:$0xf]
        %v1732 = vld [vmem:[#allocation10 + $0x68] sm:$0xf]
        %v1733 = vld [vmem:[#allocation10 + $0x6c] sm:$0xf]
        %v1734 = vld [vmem:[#allocation10 + $0x70] sm:$0xf]
        %v1735 = vld [vmem:[#allocation10 + $0x74] sm:$0xf]
        %v1736 = vld [vmem:[#allocation10 + $0x78] sm:$0xf]
        %v1737 = vld [vmem:[#allocation10 + $0x7c] sm:$0xf]
        %v1738 = vld [vmem:[%s8] sm:$0x1]
        %v1740 = vlaneseq
        %v1741 = vshrl.u32 %v1740, 7
        %v1742 = vsub.s32 0, %v1741
        %v1743 = vrot.slane %v1738, %v1742
        %v1777 = vunpack.c.l.b16 %v1706
        %v1778 = vunpack.c.l.b16 %v1707
        %v1779 = vunpack.c.l.b16 %v1708
        %v1780 = vunpack.c.l.b16 %v1709
        %v1781 = vunpack.c.l.b16 %v1710
        %v1782 = vunpack.c.l.b16 %v1711
        %v1783 = vunpack.c.l.b16 %v1712
        %v1784 = vunpack.c.l.b16 %v1713
        %v1785 = vunpack.c.l.b16 %v1714
        %v1786 = vunpack.c.l.b16 %v1715
        %v1787 = vunpack.c.l.b16 %v1716
        %v1788 = vunpack.c.l.b16 %v1717
        %v1789 = vunpack.c.l.b16 %v1718
        %v1790 = vunpack.c.l.b16 %v1719
        %v1791 = vunpack.c.l.b16 %v1720
        %v1792 = vunpack.c.l.b16 %v1721
        %v1793 = vunpack.c.l.b16 %v1722
        %v1794 = vunpack.c.l.b16 %v1723
        %v1795 = vunpack.c.l.b16 %v1724
        %v1796 = vunpack.c.l.b16 %v1725
        %v1797 = vunpack.c.l.b16 %v1726
        %v1798 = vunpack.c.l.b16 %v1727
        %v1799 = vunpack.c.l.b16 %v1728
        %v1800 = vunpack.c.l.b16 %v1729
        %v1801 = vunpack.c.l.b16 %v1730
        %v1802 = vunpack.c.l.b16 %v1731
        %v1803 = vunpack.c.l.b16 %v1732
        %v1804 = vunpack.c.l.b16 %v1733
        %v1805 = vunpack.c.l.b16 %v1734
        %v1806 = vunpack.c.l.b16 %v1735
        %v1807 = vunpack.c.l.b16 %v1736
        %v1808 = vunpack.c.l.b16 %v1737
        %v1809 = vpack.c.b16 %v1778, %v1777
        %v1810 = vpack.c.b16 %v1780, %v1779
        %v1811 = vpack.c.b16 %v1782, %v1781
        %v1812 = vpack.c.b16 %v1784, %v1783
        %v1813 = vpack.c.b16 %v1786, %v1785
        %v1814 = vpack.c.b16 %v1788, %v1787
        %v1815 = vpack.c.b16 %v1790, %v1789
        %v1816 = vpack.c.b16 %v1792, %v1791
        %v1817 = vpack.c.b16 %v1794, %v1793
        %v1818 = vpack.c.b16 %v1796, %v1795
        %v1819 = vpack.c.b16 %v1798, %v1797
        %v1820 = vpack.c.b16 %v1800, %v1799
        %v1821 = vpack.c.b16 %v1802, %v1801
        %v1822 = vpack.c.b16 %v1804, %v1803
        %v1823 = vpack.c.b16 %v1806, %v1805
        %v1824 = vpack.c.b16 %v1808, %v1807
        %1841 = vmatprep.subr.bf16.mxu0 0
        %1842 = vmatpush1.bf16.msra.mxu0 %v1809
        %1843 = vmatprep.subr.bf16.mxu0 0
        %1844 = vmatpush1.bf16.msra.mxu0 %v1810
        %1845 = vmatprep.subr.bf16.mxu0 0
        %1846 = vmatpush1.bf16.msra.mxu0 %v1811
        %1847 = vmatprep.subr.bf16.mxu0 0
        %1848 = vmatpush1.bf16.msra.mxu0 %v1812
        %1849 = vmatprep.subr.bf16.mxu0 0
        %1850 = vmatpush1.bf16.msra.mxu0 %v1813
        %1851 = vmatprep.subr.bf16.mxu0 0
        %1852 = vmatpush1.bf16.msra.mxu0 %v1814
        %1853 = vmatprep.subr.bf16.mxu0 0
        %1854 = vmatpush1.bf16.msra.mxu0 %v1815
        %1855 = vmatprep.subr.bf16.mxu0 0
        %1856 = vmatpush1.bf16.msra.mxu0 %v1816
        %1857 = vmatprep.subr.bf16.mxu0 0
        %1858 = vmatpush1.bf16.msra.mxu0 %v1817
        %1859 = vmatprep.subr.bf16.mxu0 0
        %1860 = vmatpush1.bf16.msra.mxu0 %v1818
        %1861 = vmatprep.subr.bf16.mxu0 0
        %1862 = vmatpush1.bf16.msra.mxu0 %v1819
        %1863 = vmatprep.subr.bf16.mxu0 0
        %1864 = vmatpush1.bf16.msra.mxu0 %v1820
        %1865 = vmatprep.subr.bf16.mxu0 0
        %1866 = vmatpush1.bf16.msra.mxu0 %v1821
        %1867 = vmatprep.subr.bf16.mxu0 0
        %1868 = vmatpush1.bf16.msra.mxu0 %v1822
        %1869 = vmatprep.subr.bf16.mxu0 0
        %1870 = vmatpush1.bf16.msra.mxu0 %v1823
        %1871 = vmatprep.subr.bf16.mxu0 0
        %1872 = vmatpush1.bf16.msra.mxu0 %v1824
        %1873 = vmatprep.mubr.bf16.mxu0 %v1691
        %1874 = vmatmul.mubr.bf16.gmra.mrb[0].mxu0 %v1690
        %v1875 = vpop.f32.mrb[0].mxu0
        %v1876 = vadd.f32 %v1743, %v1875
        %v1877 = vpop.f32.mrb[0].mxu0
        %v1878 = vpop.f32.mrb[0].mxu0
        %v1879 = vadd.f32 %v1743, %v1878
        %v1880 = vpop.f32.mrb[0].mxu0
        %1881 = vmatprep.mubr.bf16.mxu0 %v1693
        %1882 = vmatmul.mubr.bf16.gmra.mrb[0].mxu0 %v1692
        %v1883 = vpop.f32.mrb[0].mxu0
        %v1884 = vadd.f32 %v1743, %v1883
        %v1885 = vpop.f32.mrb[0].mxu0
        %v1886 = vpop.f32.mrb[0].mxu0
        %v1887 = vadd.f32 %v1743, %v1886
        %v1888 = vpop.f32.mrb[0].mxu0
        %1889 = vmatprep.mubr.bf16.mxu0 %v1695
        %1890 = vmatmul.mubr.bf16.gmra.mrb[0].mxu0 %v1694
        %v1891 = vpop.f32.mrb[0].mxu0
        %v1892 = vadd.f32 %v1743, %v1891
        %v1893 = vpop.f32.mrb[0].mxu0
        %v1894 = vpop.f32.mrb[0].mxu0
        %v1895 = vadd.f32 %v1743, %v1894
        %v1896 = vpop.f32.mrb[0].mxu0
        %1897 = vmatprep.mubr.bf16.mxu0 %v1697
        %1898 = vmatmul.mubr.bf16.gmra.mrb[0].mxu0 %v1696
        %v1899 = vpop.f32.mrb[0].mxu0
        %v1900 = vadd.f32 %v1743, %v1899
        %v1901 = vpop.f32.mrb[0].mxu0
        %v1902 = vpop.f32.mrb[0].mxu0
        %v1903 = vadd.f32 %v1743, %v1902
        %v1904 = vpop.f32.mrb[0].mxu0
        %1905 = vmatprep.mubr.bf16.mxu0 %v1699
        %1906 = vmatmul.mubr.bf16.gmra.mrb[0].mxu0 %v1698
        %v1907 = vpop.f32.mrb[0].mxu0
        %v1908 = vadd.f32 %v1743, %v1907
        %v1909 = vpop.f32.mrb[0].mxu0
        %v1910 = vpop.f32.mrb[0].mxu0
        %v1911 = vadd.f32 %v1743, %v1910
        %v1912 = vpop.f32.mrb[0].mxu0
        %1913 = vmatprep.mubr.bf16.mxu0 %v1701
        %1914 = vmatmul.mubr.bf16.gmra.mrb[0].mxu0 %v1700
        %v1915 = vpop.f32.mrb[0].mxu0
        %v1916 = vadd.f32 %v1743, %v1915
        %v1917 = vpop.f32.mrb[0].mxu0
        %v1918 = vpop.f32.mrb[0].mxu0
        %v1919 = vadd.f32 %v1743, %v1918
        %v1920 = vpop.f32.mrb[0].mxu0
        %1921 = vmatprep.mubr.bf16.mxu0 %v1703
        %1922 = vmatmul.mubr.bf16.gmra.mrb[0].mxu0 %v1702
        %v1923 = vpop.f32.mrb[0].mxu0
        %v1924 = vadd.f32 %v1743, %v1923
        %v1925 = vpop.f32.mrb[0].mxu0
        %v1926 = vpop.f32.mrb[0].mxu0
        %v1927 = vadd.f32 %v1743, %v1926
        %v1928 = vpop.f32.mrb[0].mxu0
        %1929 = vmatprep.mubr.bf16.mxu0 %v1705
        %1930 = vmatmul.mubr.bf16.gmra.mrb[0].mxu0 %v1704
        %v1931 = vpop.f32.mrb[0].mxu0
        %v1932 = vadd.f32 %v1743, %v1931
        %v1933 = vpop.f32.mrb[0].mxu0
        %v1934 = vpop.f32.mrb[0].mxu0
        %v1935 = vadd.f32 %v1743, %v1934
        %v1936 = vpop.f32.mrb[0].mxu0
        %1937 = vdwg.mxu0
        %v1938 = vmax.f32 %v1876, 0.0
        %v1939 = vmax.f32 %v1879, 0.0
        %v1940 = vmax.f32 %v1884, 0.0
        %v1941 = vmax.f32 %v1887, 0.0
        %v1942 = vmax.f32 %v1892, 0.0
        %v1943 = vmax.f32 %v1895, 0.0
        %v1944 = vmax.f32 %v1900, 0.0
        %v1945 = vmax.f32 %v1903, 0.0
        %v1946 = vmax.f32 %v1908, 0.0
        %v1947 = vmax.f32 %v1911, 0.0
        %v1948 = vmax.f32 %v1916, 0.0
        %v1949 = vmax.f32 %v1919, 0.0
        %v1950 = vmax.f32 %v1924, 0.0
        %v1951 = vmax.f32 %v1927, 0.0
        %v1952 = vmax.f32 %v1932, 0.0
        %v1953 = vmax.f32 %v1935, 0.0
        %v1954 = vpack.c.bf16 %v1939, %v1938
        %v1955 = vpack.c.bf16 %v1941, %v1940
        %v1956 = vpack.c.bf16 %v1943, %v1942
        %v1957 = vpack.c.bf16 %v1945, %v1944
        %v1958 = vpack.c.bf16 %v1947, %v1946
        %v1959 = vpack.c.bf16 %v1949, %v1948
        %v1960 = vpack.c.bf16 %v1951, %v1950
        %v1961 = vpack.c.bf16 %v1953, %v1952
        %v1962 = vld [vmem:[#allocation11] sm:$0xf]
        %v1963 = vld [vmem:[#allocation11 + $0x4] sm:$0xf]
        %v1964 = vld [vmem:[#allocation11 + $0x8] sm:$0xf]
        %v1965 = vld [vmem:[#allocation11 + $0xc] sm:$0xf]
        %v1966 = vld [vmem:[#allocation11 + $0x10] sm:$0xf]
        %v1967 = vld [vmem:[#allocation11 + $0x14] sm:$0xf]
        %v1968 = vld [vmem:[#allocation11 + $0x18] sm:$0xf]
        %v1969 = vld [vmem:[#allocation11 + $0x1c] sm:$0xf]
        %v1970 = vld [vmem:[#allocation11 + $0x20] sm:$0xf]
        %v1971 = vld [vmem:[#allocation11 + $0x24] sm:$0xf]
        %v1972 = vld [vmem:[#allocation11 + $0x28] sm:$0xf]
        %v1973 = vld [vmem:[#allocation11 + $0x2c] sm:$0xf]
        %v1974 = vld [vmem:[#allocation11 + $0x30] sm:$0xf]
        %v1975 = vld [vmem:[#allocation11 + $0x34] sm:$0xf]
        %v1976 = vld [vmem:[#allocation11 + $0x38] sm:$0xf]
        %v1977 = vld [vmem:[#allocation11 + $0x3c] sm:$0xf]
        %v1978 = vld [vmem:[%s10] sm:$0x1]
        %v1980 = vlaneseq
        %v1981 = vshrl.u32 %v1980, 7
        %v1982 = vsub.s32 0, %v1981
        %v1983 = vrot.slane %v1978, %v1982
        %v2001 = vunpack.c.l.b16 %v1962
        %v2002 = vunpack.c.l.b16 %v1963
        %v2003 = vunpack.c.l.b16 %v1964
        %v2004 = vunpack.c.l.b16 %v1965
        %v2005 = vunpack.c.l.b16 %v1966
        %v2006 = vunpack.c.l.b16 %v1967
        %v2007 = vunpack.c.l.b16 %v1968
        %v2008 = vunpack.c.l.b16 %v1969
        %v2009 = vunpack.c.l.b16 %v1970
        %v2010 = vunpack.c.l.b16 %v1971
        %v2011 = vunpack.c.l.b16 %v1972
        %v2012 = vunpack.c.l.b16 %v1973
        %v2013 = vunpack.c.l.b16 %v1974
        %v2014 = vunpack.c.l.b16 %v1975
        %v2015 = vunpack.c.l.b16 %v1976
        %v2016 = vunpack.c.l.b16 %v1977
        %v2017 = vpack.c.b16 %v2002, %v2001
        %v2018 = vpack.c.b16 %v2004, %v2003
        %v2019 = vpack.c.b16 %v2006, %v2005
        %v2020 = vpack.c.b16 %v2008, %v2007
        %v2021 = vpack.c.b16 %v2010, %v2009
        %v2022 = vpack.c.b16 %v2012, %v2011
        %v2023 = vpack.c.b16 %v2014, %v2013
        %v2024 = vpack.c.b16 %v2016, %v2015
        %2033 = vmatprep.subr.bf16.mxu0 0
        %2034 = vmatpush1.bf16.msra.mxu0 %v2017
        %2035 = vmatprep.subr.bf16.mxu0 0
        %2036 = vmatpush1.bf16.msra.mxu0 %v2018
        %2037 = vmatprep.subr.bf16.mxu0 0
        %2038 = vmatpush1.bf16.msra.mxu0 %v2019
        %2039 = vmatprep.subr.bf16.mxu0 0
        %2040 = vmatpush1.bf16.msra.mxu0 %v2020
        %2041 = vmatprep.subr.bf16.mxu0 0
        %2042 = vmatpush1.bf16.msra.mxu0 %v2021
        %2043 = vmatprep.subr.bf16.mxu0 0
        %2044 = vmatpush1.bf16.msra.mxu0 %v2022
        %2045 = vmatprep.subr.bf16.mxu0 0
        %2046 = vmatpush1.bf16.msra.mxu0 %v2023
        %2047 = vmatprep.subr.bf16.mxu0 0
        %2048 = vmatpush1.bf16.msra.mxu0 %v2024
        %2049 = vmatprep.subr.bf16.mxu0 0
        %2050 = vmatpush1.bf16.msra.mxu0 0
        %2051 = vmatprep.subr.bf16.mxu0 0
        %2052 = vmatpush1.bf16.msra.mxu0 0
        %2053 = vmatprep.subr.bf16.mxu0 0
        %2054 = vmatpush1.bf16.msra.mxu0 0
        %2055 = vmatprep.subr.bf16.mxu0 0
        %2056 = vmatpush1.bf16.msra.mxu0 0
        %2057 = vmatprep.subr.bf16.mxu0 0
        %2058 = vmatpush1.bf16.msra.mxu0 0
        %2059 = vmatprep.subr.bf16.mxu0 0
        %2060 = vmatpush1.bf16.msra.mxu0 0
        %2061 = vmatprep.subr.bf16.mxu0 0
        %2062 = vmatpush1.bf16.msra.mxu0 0
        %2063 = vmatprep.subr.bf16.mxu0 0
        %2064 = vmatpush1.bf16.msra.mxu0 0
        %2065 = vmatprep.mubr.bf16.mxu0 0
        %2066 = vmatmul.mubr.bf16.gmra.mrb[0].mxu0 %v1954
        %v2067 = vpop.f32.mrb[0].mxu0
        %v2068 = vadd.f32 %v1983, %v2067
        %v2069 = vpop.f32.mrb[0].mxu0
        %v2070 = vpop.f32.mrb[0].mxu0
        %v2071 = vadd.f32 %v1983, %v2070
        %v2072 = vpop.f32.mrb[0].mxu0
        %2073 = vmatprep.mubr.bf16.mxu0 0
        %2074 = vmatmul.mubr.bf16.gmra.mrb[0].mxu0 %v1955
        %v2075 = vpop.f32.mrb[0].mxu0
        %v2076 = vadd.f32 %v1983, %v2075
        %v2077 = vpop.f32.mrb[0].mxu0
        %v2078 = vpop.f32.mrb[0].mxu0
        %v2079 = vadd.f32 %v1983, %v2078
        %v2080 = vpop.f32.mrb[0].mxu0
        %2081 = vmatprep.mubr.bf16.mxu0 0
        %2082 = vmatmul.mubr.bf16.gmra.mrb[0].mxu0 %v1956
        %v2083 = vpop.f32.mrb[0].mxu0
        %v2084 = vadd.f32 %v1983, %v2083
        %v2085 = vpop.f32.mrb[0].mxu0
        %v2086 = vpop.f32.mrb[0].mxu0
        %v2087 = vadd.f32 %v1983, %v2086
        %v2088 = vpop.f32.mrb[0].mxu0
        %2089 = vmatprep.mubr.bf16.mxu0 0
        %2090 = vmatmul.mubr.bf16.gmra.mrb[0].mxu0 %v1957
        %v2091 = vpop.f32.mrb[0].mxu0
        %v2092 = vadd.f32 %v1983, %v2091
        %v2093 = vpop.f32.mrb[0].mxu0
        %v2094 = vpop.f32.mrb[0].mxu0
        %v2095 = vadd.f32 %v1983, %v2094
        %v2096 = vpop.f32.mrb[0].mxu0
        %2097 = vmatprep.mubr.bf16.mxu0 0
        %2098 = vmatmul.mubr.bf16.gmra.mrb[0].mxu0 %v1958
        %v2099 = vpop.f32.mrb[0].mxu0
        %v2100 = vadd.f32 %v1983, %v2099
        %v2101 = vpop.f32.mrb[0].mxu0
        %v2102 = vpop.f32.mrb[0].mxu0
        %v2103 = vadd.f32 %v1983, %v2102
        %v2104 = vpop.f32.mrb[0].mxu0
        %2105 = vmatprep.mubr.bf16.mxu0 0
        %2106 = vmatmul.mubr.bf16.gmra.mrb[0].mxu0 %v1959
        %v2107 = vpop.f32.mrb[0].mxu0
        %v2108 = vadd.f32 %v1983, %v2107
        %v2109 = vpop.f32.mrb[0].mxu0
        %v2110 = vpop.f32.mrb[0].mxu0
        %v2111 = vadd.f32 %v1983, %v2110
        %v2112 = vpop.f32.mrb[0].mxu0
        %2113 = vmatprep.mubr.bf16.mxu0 0
        %2114 = vmatmul.mubr.bf16.gmra.mrb[0].mxu0 %v1960
        %v2115 = vpop.f32.mrb[0].mxu0
        %v2116 = vadd.f32 %v1983, %v2115
        %v2117 = vpop.f32.mrb[0].mxu0
        %v2118 = vpop.f32.mrb[0].mxu0
        %v2119 = vadd.f32 %v1983, %v2118
        %v2120 = vpop.f32.mrb[0].mxu0
        %2121 = vmatprep.mubr.bf16.mxu0 0
        %2122 = vmatmul.mubr.bf16.gmra.mrb[0].mxu0 %v1961
        %v2123 = vpop.f32.mrb[0].mxu0
        %v2124 = vadd.f32 %v1983, %v2123
        %v2125 = vpop.f32.mrb[0].mxu0
        %v2126 = vpop.f32.mrb[0].mxu0
        %v2127 = vadd.f32 %v1983, %v2126
        %v2128 = vpop.f32.mrb[0].mxu0
        %2129 = vdwg.mxu0
        %2130 = vst [vmem:[%s477] sm:$0xff] %v2068
        %2131 = vst [vmem:[%s477 + $0x8] sm:$0xff] %v2071
        %2132 = vst [vmem:[%s477 + $0x10] sm:$0xff] %v2076
        %2133 = vst [vmem:[%s477 + $0x18] sm:$0xff] %v2079
        %2134 = vst [vmem:[%s477 + $0x20] sm:$0xff] %v2084
        %2135 = vst [vmem:[%s477 + $0x28] sm:$0xff] %v2087
        %2136 = vst [vmem:[%s477 + $0x30] sm:$0xff] %v2092
        %2137 = vst [vmem:[%s477 + $0x38] sm:$0xff] %v2095
        %2138 = vst [vmem:[%s477 + $0x40] sm:$0xff] %v2100
        %2139 = vst [vmem:[%s477 + $0x48] sm:$0xff] %v2103
        %2140 = vst [vmem:[%s477 + $0x50] sm:$0xff] %v2108
        %2141 = vst [vmem:[%s477 + $0x58] sm:$0xff] %v2111
        %2142 = vst [vmem:[%s477 + $0x60] sm:$0xff] %v2116
        %2143 = vst [vmem:[%s477 + $0x68] sm:$0xff] %v2119
        %2144 = vst [vmem:[%s477 + $0x70] sm:$0xff] %v2124
        %2145 = vst [vmem:[%s477 + $0x78] sm:$0xff] %v2127
        %s2146 = sand.u32 %s275, 1
        %s2147 = scalar_lea.sflag [#allocation4], %s2146
        %s2148 = sand.u32 %s275, 1
        %s2149 = smul.addr %s2148, 128
        %s2150 = scalar_lea.vmem [#allocation13], %s2149
        // Predicated region
        $region89: #{tpu_custom_call.1} parent=63 // pred_check
          %p2151 = pneg %p285
        $region90: #{tpu_custom_call.1} parent=63 // pred_check_branch
          %2153 = sbr.rel (%p2151) target = $region92
        $region91: #{tpu_custom_call.1} parent=63 // pred_region
          %s2154 = smul.u32 16, %s31
          %s2156 = ssub.s32 2048, 2048
          %2157 = vsyncadd %s2147, %s2156
          %s2158 = smul.addr %s2154, 128
          %s2159 = scalar_lea.hbm %s11, %s2158
          %s2160 = sshll.u32 %s2150, 4
          %s2161 = int_to_ptr.vmem [resolvable:$true] %s2160
          %2166 = dma.vmem_to_hbm [thread:$0]  %s2161, 2048, %s2159, %s2147, 128, 128, 8
        $region92: #{tpu_custom_call.1} parent=63 // pred_fallthru
          _
      $region64: #{tpu_custom_call.1} parent=5 // pred_fallthru
        _
      %p2167 = scmp.le.s32.totalorder 2, %s26
      // Predicated region
      $region93: #{tpu_custom_call.1} parent=5 // pred_check
        %p2168 = pneg %p2167
      $region94: #{tpu_custom_call.1} parent=5 // pred_check_branch
        %2170 = sbr.rel (%p2168) target = $region96
      $region95: #{tpu_custom_call.1} parent=5 // pred_region
        %s2171 = ssub.s32 %s26, 2
        // Predicated region
        $region97: #{tpu_custom_call.1} parent=95 // pred_check
          %p2172 = pneg %p291
        $region98: #{tpu_custom_call.1} parent=95 // pred_check_branch
          %2174 = sbr.rel (%p2172) target = $region100
        $region99: #{tpu_custom_call.1} parent=95 // pred_region
          %s2175 = sand.u32 %s276, 1
          %s2176 = scalar_lea.sflag [#allocation4], %s2175
          %s2177 = sand.u32 %s276, 1
          %s2178 = smul.addr %s2177, 128
          %s2179 = scalar_lea.vmem [#allocation13], %s2178
          %2180 = dma.done %s2176, 2048
        $region100: #{tpu_custom_call.1} parent=95 // pred_fallthru
          _
      $region96: #{tpu_custom_call.1} parent=5 // pred_fallthru
        _
    $region6: #{tpu_custom_call.1} parent=1 // loop_footer
      %s30 = sadd.s32 1, %s26
    $region7: #{tpu_custom_call.1} parent=1 // loop_footer_branch
      %25 = sbr.rel target = $region3
    $region8: #{tpu_custom_call.1} parent=1 // loop_exit
      _
    %2181 = vsyncpa [#allocation3], 1
    %s2182 = scalar_lea.sflag [#allocation3], 1
    %2183 = vsyncpa %s2182, 1
    %2184 = vsyncpa [#allocation6], 1
    %2185 = vsyncpa [#allocation9], 1
    %2186 = vsyncpa [#allocation12], 1
    %2187 = vsyncpa [#allocation4], 1
    %s2188 = scalar_lea.sflag [#allocation4], 1
    %2189 = vsyncpa %s2188, 1

</llo_original>
